<compile_context>
chip_gen: v5e
topology: v5e:2x2
jax: 0.10.0
libtpu: 0.0.40
codegen_flags: <defaults>
</compile_context>

<pallas_src>
import functools

import jax
import jax.numpy as jnp
from jax.experimental import pallas as pl
from jax.experimental.pallas import tpu as pltpu


# ---------------------------------------------------------------------------
# Optional single-buffering of constant weight blocks (halves resident-weight
# VMEM vs. the default double-buffering). Fall back silently if this JAX
# version does not expose BlockSpec(pipeline_mode=pl.Buffered(...)).
# ---------------------------------------------------------------------------
def _probe_single_buffer_kwargs():
    try:
        kwargs = {"pipeline_mode": pl.Buffered(1)}
        pl.BlockSpec((8, 128), lambda i: (0, 0), **kwargs)  # construction probe
        return kwargs
    except Exception:
        return {}


_SINGLE_BUFFER_KWARGS = _probe_single_buffer_kwargs()


def _vmem_budget_bytes(L, TL, TKV, D, H, heads):
    """Rough VMEM budget: resident bf16 weights + double-buffered activation
    blocks + per-step f32 working set, with 2x headroom (floor 32 MiB)."""
    hd = D // heads
    BF16, F32 = 2, 4
    weights = (4 * D * D + 2 * D * H) * BF16                    # wq/wk/wv/wout/w1/w2
    small = (3 * heads * hd + 2 * D + H + 4 * D) * F32          # biases + LN params
    io_blocks = 2 * (TL * D + L * D + TL * D) * F32             # xq, xf, out (x2 bufs)
    work = ((TL + 2 * L) * hd * (F32 + BF16)                    # q/k/v of one head
            + TL * TKV * F32                                    # score chunk
            + TL * hd * F32 + TL * H * F32 + 6 * TL * D * F32)  # acc / ffn / LN temps
    est = weights + small + io_blocks + work
    return int(min(max(2 * est, 32 * 1024 * 1024), 96 * 1024 * 1024))


def encoder_layer_kernel(
    xq_ref,        # (1, TL, D) f32  query-row tile (residual path stays f32)
    xf_ref,        # (1, L, D)  f32  full sequence (source of K/V)
    wq_ref,        # (heads, D, hd) bf16, 1/sqrt(hd) folded in
    wk_ref,        # (heads, D, hd) bf16
    wv_ref,        # (heads, D, hd) bf16
    bq_ref,        # (heads, 1, hd) f32, 1/sqrt(hd) folded in
    bk_ref,        # (heads, 1, hd) f32
    bv_ref,        # (heads, 1, hd) f32
    wout_ref,      # (heads, hd, D) bf16 (per-head slabs of the output proj)
    bout_ref,      # (1, D) f32
    w1_ref,        # (D, H) bf16
    b1_ref,        # (1, H) f32
    w2_ref,        # (H, D) bf16
    b2_ref,        # (1, D) f32
    g1_ref,        # (1, D) f32  layernorm-1 gamma
    be1_ref,       # (1, D) f32  layernorm-1 beta
    g2_ref,        # (1, D) f32  layernorm-2 gamma
    be2_ref,       # (1, D) f32  layernorm-2 beta
    o_ref,         # (1, TL, D)
    *,
    heads: int,
    kv_chunk: int,
):
    f32 = jnp.float32
    bf16 = jnp.bfloat16

    xq = xq_ref[0]                      # (TL, D) f32 — kept f32 for the residual
    TL, D = xq.shape
    L = xf_ref.shape[1]
    hd = D // heads
    nkv = L // kv_chunk

    xq_b = xq.astype(bf16)              # bf16 operands for the MXU
    xf_b = xf_ref[0].astype(bf16)

    # ---- Multi-head self attention --------------------------------------
    # Per-head weight slabs are indexed on the leading axis (no lane slicing);
    # the output projection is accumulated per head (no concatenate).
    attn_acc = jnp.zeros((TL, D), f32)
    for h in range(heads):              # static unroll over heads
        qh = (jnp.dot(xq_b, wq_ref[h], preferred_element_type=f32)
              + bq_ref[h]).astype(bf16)                       # (TL, hd), pre-scaled
        kh = (jnp.dot(xf_b, wk_ref[h], preferred_element_type=f32)
              + bk_ref[h]).astype(bf16)                       # (L, hd)
        vh = (jnp.dot(xf_b, wv_ref[h], preferred_element_type=f32)
              + bv_ref[h]).astype(bf16)                       # (L, hd)

        # Online softmax over KV chunks (never materialises (TL, L) when
        # kv_chunk < L; exact softmax, normalised once at the end).
        m = jnp.full((TL, 1), -jnp.inf, f32)
        l = jnp.zeros((TL, 1), f32)
        acc = jnp.zeros((TL, hd), f32)
        for c in range(nkv):
            kc = kh[c * kv_chunk:(c + 1) * kv_chunk, :]
            vc = vh[c * kv_chunk:(c + 1) * kv_chunk, :]
            s = jnp.dot(qh, kc.T, preferred_element_type=f32)       # (TL, kv_chunk)
            m_new = jnp.maximum(m, jnp.max(s, axis=-1, keepdims=True))
            alpha = jnp.exp(m - m_new)
            p = jnp.exp(s - m_new)
            l = alpha * l + jnp.sum(p, axis=-1, keepdims=True)
            acc = alpha * acc + jnp.dot(p.astype(bf16), vc,
                                        preferred_element_type=f32)
            m = m_new

        head_out = (acc * pl.reciprocal(l, approx=True)).astype(bf16)  # (TL, hd)
        attn_acc = attn_acc + jnp.dot(head_out, wout_ref[h],
                                      preferred_element_type=f32)

    attn_out = attn_acc + bout_ref[...]

    # ---- one-pass LayerNorm ---------------------------------------------
    def layer_norm(hv, g, b):
        mean = jnp.mean(hv, axis=-1, keepdims=True)
        msq = jnp.mean(hv * hv, axis=-1, keepdims=True)
        var = jnp.maximum(msq - mean * mean, 0.0)
        return (hv - mean) * jax.lax.rsqrt(var + 1e-5) * g + b

    n1 = layer_norm(xq + attn_out, g1_ref[...], be1_ref[...])

    # ---- Feed-forward -----------------------------------------------------
    ff = jnp.dot(n1.astype(bf16), w1_ref[...], preferred_element_type=f32) + b1_ref[...]
    ff = jnp.maximum(ff, 0.0)
    ff = jnp.dot(ff.astype(bf16), w2_ref[...], preferred_element_type=f32) + b2_ref[...]

    n2 = layer_norm(n1 + ff, g2_ref[...], be2_ref[...])
    o_ref[0] = n2.astype(o_ref.dtype)


def transformer_encoder_layer(x, params, *, heads, q_tile=256, kv_chunk=512):
    B, L, D = x.shape
    H = params["w1"].shape[1]
    assert D % heads == 0
    hd = D // heads

    TL = min(q_tile, L)
    assert L % TL == 0, "sequence length must be divisible by the query tile"
    TKV = min(kv_chunk, L)
    assert L % TKV == 0, "sequence length must be divisible by the KV chunk"

    # ---- wrapper-side parameter plumbing (keeps relayouts out of the kernel)
    bf16 = jnp.bfloat16
    scale = 1.0 / jnp.sqrt(jnp.float32(hd))

    w3 = params["wqkv"].reshape(D, 3, heads, hd)     # columns = ({q,k,v}, head, hd)
    b3 = params["bqkv"].reshape(3, heads, hd)
    wq = (jnp.transpose(w3[:, 0], (1, 0, 2)) * scale).astype(bf16)   # (heads, D, hd)
    wk = jnp.transpose(w3[:, 1], (1, 0, 2)).astype(bf16)
    wv = jnp.transpose(w3[:, 2], (1, 0, 2)).astype(bf16)
    bq = (b3[0] * scale)[:, None, :]                                 # (heads, 1, hd)
    bk = b3[1][:, None, :]
    bv = b3[2][:, None, :]
    wout_h = params["wout"].reshape(heads, hd, D).astype(bf16)       # (heads, hd, D)
    w1 = params["w1"].astype(bf16)
    w2 = params["w2"].astype(bf16)

    # Single-buffer the constant weight blocks only when they are big enough
    # for double-buffering to matter (and the JAX version supports it).
    resident_weight_bytes = 2 * (4 * D * D + 2 * D * H)
    weight_kwargs = (_SINGLE_BUFFER_KWARGS
                     if resident_weight_bytes > 4 * 1024 * 1024 else {})

    def const_spec(shape):
        return pl.BlockSpec(shape, lambda b, i: (0,) * len(shape), **weight_kwargs)

    kernel = functools.partial(encoder_layer_kernel, heads=heads, kv_chunk=TKV)

    grid = (B, L // TL)
    return pl.pallas_call(
        kernel,
        out_shape=jax.ShapeDtypeStruct((B, L, D), x.dtype),
        grid_spec=pltpu.PrefetchScalarGridSpec(
            num_scalar_prefetch=0,
            grid=grid,
            in_specs=[
                pl.BlockSpec((1, TL, D), lambda b, i: (b, i, 0)),   # x: query tile
                pl.BlockSpec((1, L, D), lambda b, i: (b, 0, 0)),    # x: full seq (K/V)
                const_spec((heads, D, hd)),    # wq (scaled)
                const_spec((heads, D, hd)),    # wk
                const_spec((heads, D, hd)),    # wv
                const_spec((heads, 1, hd)),    # bq (scaled)
                const_spec((heads, 1, hd)),    # bk
                const_spec((heads, 1, hd)),    # bv
                const_spec((heads, hd, D)),    # wout (per-head slabs)
                const_spec((1, D)),            # bout
                const_spec((D, H)),            # w1
                const_spec((1, H)),            # b1
                const_spec((H, D)),            # w2
                const_spec((1, D)),            # b2
                const_spec((1, D)),            # gamma1
                const_spec((1, D)),            # beta1
                const_spec((1, D)),            # gamma2
                const_spec((1, D)),            # beta2
            ],
            out_specs=pl.BlockSpec((1, TL, D), lambda b, i: (b, i, 0)),
        ),
        compiler_params=pltpu.CompilerParams(
            dimension_semantics=("parallel", "parallel"),
            vmem_limit_bytes=_vmem_budget_bytes(L, TL, TKV, D, H, heads),
        ),
    )(
        x, x,
        wq, wk, wv, bq, bk, bv,
        wout_h, params["bout"],
        w1, params["b1"], w2, params["b2"],
        params["gamma1"], params["beta1"], params["gamma2"], params["beta2"],
    )


def init_params(key, d_model, heads, hidden_dim):
    """Deterministic parameter init. Linear weights stored as (in, out)."""
    ks = jax.random.split(key, 8)

    def lin(k, fan_in, fan_out):
        bound = 1.0 / jnp.sqrt(fan_in)
        kw, kb = jax.random.split(k)
        w = jax.random.uniform(kw, (fan_in, fan_out), jnp.float32, -bound, bound)
        b = jax.random.uniform(kb, (1, fan_out), jnp.float32, -bound, bound)
        return w, b

    wqkv, bqkv = lin(ks[0], d_model, 3 * d_model)
    wout, bout = lin(ks[1], d_model, d_model)
    w1, b1 = lin(ks[2], d_model, hidden_dim)
    w2, b2 = lin(ks[3], hidden_dim, d_model)
    return dict(
        wqkv=wqkv, bqkv=bqkv, wout=wout, bout=bout,
        w1=w1, b1=b1, w2=w2, b2=b2,
        gamma1=jnp.ones((1, d_model), jnp.float32),
        beta1=jnp.zeros((1, d_model), jnp.float32),
        gamma2=jnp.ones((1, d_model), jnp.float32),
        beta2=jnp.zeros((1, d_model), jnp.float32),
    )


def reference_forward(x, p, heads):
    """Plain-JAX f32 reference (eval-mode dropout = identity) for sanity check."""
    B, L, D = x.shape
    hd = D // heads
    qkv = x @ p["wqkv"] + p["bqkv"][0]
    q, k, v = jnp.split(qkv, 3, axis=-1)
    q = q.reshape(B, L, heads, hd).transpose(0, 2, 1, 3)
    k = k.reshape(B, L, heads, hd).transpose(0, 2, 1, 3)
    v = v.reshape(B, L, heads, hd).transpose(0, 2, 1, 3)
    s = (q @ jnp.swapaxes(k, -2, -1)) / jnp.sqrt(jnp.float32(hd))
    a = jax.nn.softmax(s, axis=-1)
    o = (a @ v).transpose(0, 2, 1, 3).reshape(B, L, D)
    attn = o @ p["wout"] + p["bout"][0]

    def ln(h, g, b):
        mu = h.mean(-1, keepdims=True)
        var = ((h - mu) ** 2).mean(-1, keepdims=True)
        return (h - mu) * jax.lax.rsqrt(var + 1e-5) * g[0] + b[0]

    h1 = ln(x + attn, p["gamma1"], p["beta1"])
    ff = jnp.maximum(h1 @ p["w1"] + p["b1"][0], 0.0) @ p["w2"] + p["b2"][0]
    return ln(h1 + ff, p["gamma2"], p["beta2"])


if __name__ == "__main__":
    B, L, D, heads, hidden = 2, 8, 32, 4, 64
    key = jax.random.PRNGKey(0)
    kx, kp = jax.random.split(key)
    x = jax.random.normal(kx, (B, L, D), jnp.float32)
    params = init_params(kp, D, heads, hidden)

    out = transformer_encoder_layer(x, params, heads=heads)
    out = jax.block_until_ready(out)

    ref = reference_forward(x, params, heads)
    assert out.shape == (B, L, D)
    # bf16 MXU matmuls (f32 accumulation) -> relaxed tolerance vs f32 reference.
    assert jnp.allclose(out, ref, atol=5e-2, rtol=5e-2), "mismatch vs reference"
    print("KERNEL_OK")
</pallas_src>

<mosaic_0001>
module attributes {stable_mosaic.version = 11 : i64} {
  func.func @encoder_layer_kernel(%arg0: i32, %arg1: i32, %arg2: memref<1x8x32xf32, #tpu.memory_space<vmem>>, %arg3: memref<1x8x32xf32, #tpu.memory_space<vmem>>, %arg4: memref<4x32x8xbf16, #tpu.memory_space<vmem>>, %arg5: memref<4x32x8xbf16, #tpu.memory_space<vmem>>, %arg6: memref<4x32x8xbf16, #tpu.memory_space<vmem>>, %arg7: memref<4x1x8xf32, #tpu.memory_space<vmem>>, %arg8: memref<4x1x8xf32, #tpu.memory_space<vmem>>, %arg9: memref<4x1x8xf32, #tpu.memory_space<vmem>>, %arg10: memref<4x8x32xbf16, #tpu.memory_space<vmem>>, %arg11: memref<1x32xf32, #tpu.memory_space<vmem>>, %arg12: memref<32x64xbf16, #tpu.memory_space<vmem>>, %arg13: memref<1x64xf32, #tpu.memory_space<vmem>>, %arg14: memref<64x32xbf16, #tpu.memory_space<vmem>>, %arg15: memref<1x32xf32, #tpu.memory_space<vmem>>, %arg16: memref<1x32xf32, #tpu.memory_space<vmem>>, %arg17: memref<1x32xf32, #tpu.memory_space<vmem>>, %arg18: memref<1x32xf32, #tpu.memory_space<vmem>>, %arg19: memref<1x32xf32, #tpu.memory_space<vmem>>, %arg20: memref<1x8x32xf32, #tpu.memory_space<vmem>>) attributes {dimension_semantics = [#tpu.dimension_semantics<parallel>, #tpu.dimension_semantics<parallel>], iteration_bounds = array<i64: 2, 1>, scalar_prefetch = 0 : i64, scratch_operands = 0 : i64, tpu.core_type = #tpu.core_type<tc>, window_params = [{transform_indices = @transform_0, window_bounds = array<i64: 1, 8, 32>}, {transform_indices = @transform_1, window_bounds = array<i64: 1, 8, 32>}, {pipeline_mode = #tpu.pipeline_mode<synchronous>, transform_indices = @transform_2, window_bounds = array<i64: 4, 32, 8>}, {pipeline_mode = #tpu.pipeline_mode<synchronous>, transform_indices = @transform_3, window_bounds = array<i64: 4, 32, 8>}, {pipeline_mode = #tpu.pipeline_mode<synchronous>, transform_indices = @transform_4, window_bounds = array<i64: 4, 32, 8>}, {pipeline_mode = #tpu.pipeline_mode<synchronous>, transform_indices = @transform_5, window_bounds = array<i64: 4, 1, 8>}, {pipeline_mode = #tpu.pipeline_mode<synchronous>, transform_indices = @transform_6, window_bounds = array<i64: 4, 1, 8>}, {pipeline_mode = #tpu.pipeline_mode<synchronous>, transform_indices = @transform_7, window_bounds = array<i64: 4, 1, 8>}, {pipeline_mode = #tpu.pipeline_mode<synchronous>, transform_indices = @transform_8, window_bounds = array<i64: 4, 8, 32>}, {pipeline_mode = #tpu.pipeline_mode<synchronous>, transform_indices = @transform_9, window_bounds = array<i64: 1, 32>}, {pipeline_mode = #tpu.pipeline_mode<synchronous>, transform_indices = @transform_10, window_bounds = array<i64: 32, 64>}, {pipeline_mode = #tpu.pipeline_mode<synchronous>, transform_indices = @transform_11, window_bounds = array<i64: 1, 64>}, {pipeline_mode = #tpu.pipeline_mode<synchronous>, transform_indices = @transform_12, window_bounds = array<i64: 64, 32>}, {pipeline_mode = #tpu.pipeline_mode<synchronous>, transform_indices = @transform_13, window_bounds = array<i64: 1, 32>}, {pipeline_mode = #tpu.pipeline_mode<synchronous>, transform_indices = @transform_14, window_bounds = array<i64: 1, 32>}, {pipeline_mode = #tpu.pipeline_mode<synchronous>, transform_indices = @transform_15, window_bounds = array<i64: 1, 32>}, {pipeline_mode = #tpu.pipeline_mode<synchronous>, transform_indices = @transform_16, window_bounds = array<i64: 1, 32>}, {pipeline_mode = #tpu.pipeline_mode<synchronous>, transform_indices = @transform_17, window_bounds = array<i64: 1, 32>}, {transform_indices = @transform_18, window_bounds = array<i64: 1, 8, 32>}]} {
    %c0 = arith.constant 0 : index
    %c0_0 = arith.constant 0 : index
    %c0_1 = arith.constant 0 : index
    %0 = vector.load %arg2[%c0, %c0_0, %c0_1] : memref<1x8x32xf32, #tpu.memory_space<vmem>>, vector<1x8x32xf32>
    %1 = vector.shape_cast %0 : vector<1x8x32xf32> to vector<8x32xf32>
    %2 = arith.truncf %1 : vector<8x32xf32> to vector<8x32xbf16>
    %c0_2 = arith.constant 0 : index
    %c0_3 = arith.constant 0 : index
    %c0_4 = arith.constant 0 : index
    %3 = vector.load %arg3[%c0_2, %c0_3, %c0_4] : memref<1x8x32xf32, #tpu.memory_space<vmem>>, vector<1x8x32xf32>
    %4 = vector.shape_cast %3 : vector<1x8x32xf32> to vector<8x32xf32>
    %5 = arith.truncf %4 : vector<8x32xf32> to vector<8x32xbf16>
    %cst = arith.constant 0.000000e+00 : f32
    %6 = vector.broadcast %cst : f32 to vector<8x32xf32>
    %c0_5 = arith.constant 0 : index
    %c0_6 = arith.constant 0 : index
    %c0_7 = arith.constant 0 : index
    %7 = vector.load %arg4[%c0_5, %c0_6, %c0_7] : memref<4x32x8xbf16, #tpu.memory_space<vmem>>, vector<1x32x8xbf16>
    %8 = vector.shape_cast %7 : vector<1x32x8xbf16> to vector<32x8xbf16>
    %cst_8 = arith.constant dense<0.000000e+00> : vector<8x8xf32>
    %9 = tpu.matmul %2, %8, %cst_8 {dimension_numbers = #tpu.dot_dimension_numbers<[1], [0], [0], [1], [0, 0, 1, 1], [], []>} : vector<8x32xbf16>, vector<32x8xbf16>, vector<8x8xf32> -> vector<8x8xf32>
    %c0_9 = arith.constant 0 : index
    %c0_10 = arith.constant 0 : index
    %c0_11 = arith.constant 0 : index
    %10 = vector.load %arg7[%c0_9, %c0_10, %c0_11] : memref<4x1x8xf32, #tpu.memory_space<vmem>>, vector<1x1x8xf32>
    %11 = vector.shape_cast %10 : vector<1x1x8xf32> to vector<1x8xf32>
    %12 = vector.broadcast %11 : vector<1x8xf32> to vector<8x8xf32>
    %13 = arith.addf %9, %12 : vector<8x8xf32>
    %14 = arith.truncf %13 : vector<8x8xf32> to vector<8x8xbf16>
    %c0_12 = arith.constant 0 : index
    %c0_13 = arith.constant 0 : index
    %c0_14 = arith.constant 0 : index
    %15 = vector.load %arg5[%c0_12, %c0_13, %c0_14] : memref<4x32x8xbf16, #tpu.memory_space<vmem>>, vector<1x32x8xbf16>
    %16 = vector.shape_cast %15 : vector<1x32x8xbf16> to vector<32x8xbf16>
    %cst_15 = arith.constant dense<0.000000e+00> : vector<8x8xf32>
    %17 = tpu.matmul %5, %16, %cst_15 {dimension_numbers = #tpu.dot_dimension_numbers<[1], [0], [0], [1], [0, 0, 1, 1], [], []>} : vector<8x32xbf16>, vector<32x8xbf16>, vector<8x8xf32> -> vector<8x8xf32>
    %c0_16 = arith.constant 0 : index
    %c0_17 = arith.constant 0 : index
    %c0_18 = arith.constant 0 : index
    %18 = vector.load %arg8[%c0_16, %c0_17, %c0_18] : memref<4x1x8xf32, #tpu.memory_space<vmem>>, vector<1x1x8xf32>
    %19 = vector.shape_cast %18 : vector<1x1x8xf32> to vector<1x8xf32>
    %20 = vector.broadcast %19 : vector<1x8xf32> to vector<8x8xf32>
    %21 = arith.addf %17, %20 : vector<8x8xf32>
    %22 = arith.truncf %21 : vector<8x8xf32> to vector<8x8xbf16>
    %c0_19 = arith.constant 0 : index
    %c0_20 = arith.constant 0 : index
    %c0_21 = arith.constant 0 : index
    %23 = vector.load %arg6[%c0_19, %c0_20, %c0_21] : memref<4x32x8xbf16, #tpu.memory_space<vmem>>, vector<1x32x8xbf16>
    %24 = vector.shape_cast %23 : vector<1x32x8xbf16> to vector<32x8xbf16>
    %cst_22 = arith.constant dense<0.000000e+00> : vector<8x8xf32>
    %25 = tpu.matmul %5, %24, %cst_22 {dimension_numbers = #tpu.dot_dimension_numbers<[1], [0], [0], [1], [0, 0, 1, 1], [], []>} : vector<8x32xbf16>, vector<32x8xbf16>, vector<8x8xf32> -> vector<8x8xf32>
    %c0_23 = arith.constant 0 : index
    %c0_24 = arith.constant 0 : index
    %c0_25 = arith.constant 0 : index
    %26 = vector.load %arg9[%c0_23, %c0_24, %c0_25] : memref<4x1x8xf32, #tpu.memory_space<vmem>>, vector<1x1x8xf32>
    %27 = vector.shape_cast %26 : vector<1x1x8xf32> to vector<1x8xf32>
    %28 = vector.broadcast %27 : vector<1x8xf32> to vector<8x8xf32>
    %29 = arith.addf %25, %28 : vector<8x8xf32>
    %30 = arith.truncf %29 : vector<8x8xf32> to vector<8x8xbf16>
    %cst_26 = arith.constant 0xFF800000 : f32
    %31 = vector.broadcast %cst_26 : f32 to vector<8x1xf32>
    %cst_27 = arith.constant 0.000000e+00 : f32
    %32 = vector.broadcast %cst_27 : f32 to vector<8x1xf32>
    %cst_28 = arith.constant 0.000000e+00 : f32
    %33 = vector.broadcast %cst_28 : f32 to vector<8x8xf32>
    %34 = tpu.transpose %22, [1, 0] : vector<8x8xbf16> -> vector<8x8xbf16>
    %cst_29 = arith.constant dense<0.000000e+00> : vector<8x8xf32>
    %35 = tpu.matmul %14, %34, %cst_29 {dimension_numbers = #tpu.dot_dimension_numbers<[1], [0], [0], [1], [0, 0, 1, 1], [], []>} : vector<8x8xbf16>, vector<8x8xbf16>, vector<8x8xf32> -> vector<8x8xf32>
    %cst_30 = arith.constant dense<0xFF800000> : vector<8xf32>
    %36 = vector.multi_reduction <maximumf>, %35, %cst_30 [1] : vector<8x8xf32> to vector<8xf32>
    %37 = vector.shape_cast %36 : vector<8xf32> to vector<8x1xf32>
    %38 = arith.maximumf %31, %37 : vector<8x1xf32>
    %39 = arith.subf %31, %38 : vector<8x1xf32>
    %40 = math.exp %39 : vector<8x1xf32>
    %41 = vector.broadcast %38 : vector<8x1xf32> to vector<8x8xf32>
    %42 = arith.subf %35, %41 : vector<8x8xf32>
    %43 = math.exp %42 : vector<8x8xf32>
    %44 = arith.mulf %40, %32 : vector<8x1xf32>
    %cst_31 = arith.constant dense<0.000000e+00> : vector<8xf32>
    %45 = vector.multi_reduction <add>, %43, %cst_31 [1] : vector<8x8xf32> to vector<8xf32>
    %46 = vector.shape_cast %45 : vector<8xf32> to vector<8x1xf32>
    %47 = arith.addf %44, %46 : vector<8x1xf32>
    %48 = vector.broadcast %40 : vector<8x1xf32> to vector<8x8xf32>
    %49 = arith.mulf %48, %33 : vector<8x8xf32>
    %50 = arith.truncf %43 : vector<8x8xf32> to vector<8x8xbf16>
    %cst_32 = arith.constant dense<0.000000e+00> : vector<8x8xf32>
    %51 = tpu.matmul %50, %30, %cst_32 {dimension_numbers = #tpu.dot_dimension_numbers<[1], [0], [0], [1], [0, 0, 1, 1], [], []>} : vector<8x8xbf16>, vector<8x8xbf16>, vector<8x8xf32> -> vector<8x8xf32>
    %52 = arith.addf %49, %51 : vector<8x8xf32>
    %53 = tpu.reciprocal %47 {approx = true} : vector<8x1xf32> -> vector<8x1xf32>
    %54 = vector.broadcast %53 : vector<8x1xf32> to vector<8x8xf32>
    %55 = arith.mulf %52, %54 : vector<8x8xf32>
    %56 = arith.truncf %55 : vector<8x8xf32> to vector<8x8xbf16>
    %c0_33 = arith.constant 0 : index
    %c0_34 = arith.constant 0 : index
    %c0_35 = arith.constant 0 : index
    %57 = vector.load %arg10[%c0_33, %c0_34, %c0_35] : memref<4x8x32xbf16, #tpu.memory_space<vmem>>, vector<1x8x32xbf16>
    %58 = vector.shape_cast %57 : vector<1x8x32xbf16> to vector<8x32xbf16>
    %cst_36 = arith.constant dense<0.000000e+00> : vector<8x32xf32>
    %59 = tpu.matmul %56, %58, %cst_36 {dimension_numbers = #tpu.dot_dimension_numbers<[1], [0], [0], [1], [0, 0, 1, 1], [], []>} : vector<8x8xbf16>, vector<8x32xbf16>, vector<8x32xf32> -> vector<8x32xf32>
    %60 = arith.addf %6, %59 : vector<8x32xf32>
    %c1 = arith.constant 1 : index
    %c0_37 = arith.constant 0 : index
    %c0_38 = arith.constant 0 : index
    %61 = vector.load %arg4[%c1, %c0_37, %c0_38] : memref<4x32x8xbf16, #tpu.memory_space<vmem>>, vector<1x32x8xbf16>
    %62 = vector.shape_cast %61 : vector<1x32x8xbf16> to vector<32x8xbf16>
    %cst_39 = arith.constant dense<0.000000e+00> : vector<8x8xf32>
    %63 = tpu.matmul %2, %62, %cst_39 {dimension_numbers = #tpu.dot_dimension_numbers<[1], [0], [0], [1], [0, 0, 1, 1], [], []>} : vector<8x32xbf16>, vector<32x8xbf16>, vector<8x8xf32> -> vector<8x8xf32>
    %c1_40 = arith.constant 1 : index
    %c0_41 = arith.constant 0 : index
    %c0_42 = arith.constant 0 : index
    %64 = vector.load %arg7[%c1_40, %c0_41, %c0_42] : memref<4x1x8xf32, #tpu.memory_space<vmem>>, vector<1x1x8xf32>
    %65 = vector.shape_cast %64 : vector<1x1x8xf32> to vector<1x8xf32>
    %66 = vector.broadcast %65 : vector<1x8xf32> to vector<8x8xf32>
    %67 = arith.addf %63, %66 : vector<8x8xf32>
    %68 = arith.truncf %67 : vector<8x8xf32> to vector<8x8xbf16>
    %c1_43 = arith.constant 1 : index
    %c0_44 = arith.constant 0 : index
    %c0_45 = arith.constant 0 : index
    %69 = vector.load %arg5[%c1_43, %c0_44, %c0_45] : memref<4x32x8xbf16, #tpu.memory_space<vmem>>, vector<1x32x8xbf16>
    %70 = vector.shape_cast %69 : vector<1x32x8xbf16> to vector<32x8xbf16>
    %cst_46 = arith.constant dense<0.000000e+00> : vector<8x8xf32>
    %71 = tpu.matmul %5, %70, %cst_46 {dimension_numbers = #tpu.dot_dimension_numbers<[1], [0], [0], [1], [0, 0, 1, 1], [], []>} : vector<8x32xbf16>, vector<32x8xbf16>, vector<8x8xf32> -> vector<8x8xf32>
    %c1_47 = arith.constant 1 : index
    %c0_48 = arith.constant 0 : index
    %c0_49 = arith.constant 0 : index
    %72 = vector.load %arg8[%c1_47, %c0_48, %c0_49] : memref<4x1x8xf32, #tpu.memory_space<vmem>>, vector<1x1x8xf32>
    %73 = vector.shape_cast %72 : vector<1x1x8xf32> to vector<1x8xf32>
    %74 = vector.broadcast %73 : vector<1x8xf32> to vector<8x8xf32>
    %75 = arith.addf %71, %74 : vector<8x8xf32>
    %76 = arith.truncf %75 : vector<8x8xf32> to vector<8x8xbf16>
    %c1_50 = arith.constant 1 : index
    %c0_51 = arith.constant 0 : index
    %c0_52 = arith.constant 0 : index
    %77 = vector.load %arg6[%c1_50, %c0_51, %c0_52] : memref<4x32x8xbf16, #tpu.memory_space<vmem>>, vector<1x32x8xbf16>
    %78 = vector.shape_cast %77 : vector<1x32x8xbf16> to vector<32x8xbf16>
    %cst_53 = arith.constant dense<0.000000e+00> : vector<8x8xf32>
    %79 = tpu.matmul %5, %78, %cst_53 {dimension_numbers = #tpu.dot_dimension_numbers<[1], [0], [0], [1], [0, 0, 1, 1], [], []>} : vector<8x32xbf16>, vector<32x8xbf16>, vector<8x8xf32> -> vector<8x8xf32>
    %c1_54 = arith.constant 1 : index
    %c0_55 = arith.constant 0 : index
    %c0_56 = arith.constant 0 : index
    %80 = vector.load %arg9[%c1_54, %c0_55, %c0_56] : memref<4x1x8xf32, #tpu.memory_space<vmem>>, vector<1x1x8xf32>
    %81 = vector.shape_cast %80 : vector<1x1x8xf32> to vector<1x8xf32>
    %82 = vector.broadcast %81 : vector<1x8xf32> to vector<8x8xf32>
    %83 = arith.addf %79, %82 : vector<8x8xf32>
    %84 = arith.truncf %83 : vector<8x8xf32> to vector<8x8xbf16>
    %cst_57 = arith.constant 0xFF800000 : f32
    %85 = vector.broadcast %cst_57 : f32 to vector<8x1xf32>
    %cst_58 = arith.constant 0.000000e+00 : f32
    %86 = vector.broadcast %cst_58 : f32 to vector<8x1xf32>
    %cst_59 = arith.constant 0.000000e+00 : f32
    %87 = vector.broadcast %cst_59 : f32 to vector<8x8xf32>
    %88 = tpu.transpose %76, [1, 0] : vector<8x8xbf16> -> vector<8x8xbf16>
    %cst_60 = arith.constant dense<0.000000e+00> : vector<8x8xf32>
    %89 = tpu.matmul %68, %88, %cst_60 {dimension_numbers = #tpu.dot_dimension_numbers<[1], [0], [0], [1], [0, 0, 1, 1], [], []>} : vector<8x8xbf16>, vector<8x8xbf16>, vector<8x8xf32> -> vector<8x8xf32>
    %cst_61 = arith.constant dense<0xFF800000> : vector<8xf32>
    %90 = vector.multi_reduction <maximumf>, %89, %cst_61 [1] : vector<8x8xf32> to vector<8xf32>
    %91 = vector.shape_cast %90 : vector<8xf32> to vector<8x1xf32>
    %92 = arith.maximumf %85, %91 : vector<8x1xf32>
    %93 = arith.subf %85, %92 : vector<8x1xf32>
    %94 = math.exp %93 : vector<8x1xf32>
    %95 = vector.broadcast %92 : vector<8x1xf32> to vector<8x8xf32>
    %96 = arith.subf %89, %95 : vector<8x8xf32>
    %97 = math.exp %96 : vector<8x8xf32>
    %98 = arith.mulf %94, %86 : vector<8x1xf32>
    %cst_62 = arith.constant dense<0.000000e+00> : vector<8xf32>
    %99 = vector.multi_reduction <add>, %97, %cst_62 [1] : vector<8x8xf32> to vector<8xf32>
    %100 = vector.shape_cast %99 : vector<8xf32> to vector<8x1xf32>
    %101 = arith.addf %98, %100 : vector<8x1xf32>
    %102 = vector.broadcast %94 : vector<8x1xf32> to vector<8x8xf32>
    %103 = arith.mulf %102, %87 : vector<8x8xf32>
    %104 = arith.truncf %97 : vector<8x8xf32> to vector<8x8xbf16>
    %cst_63 = arith.constant dense<0.000000e+00> : vector<8x8xf32>
    %105 = tpu.matmul %104, %84, %cst_63 {dimension_numbers = #tpu.dot_dimension_numbers<[1], [0], [0], [1], [0, 0, 1, 1], [], []>} : vector<8x8xbf16>, vector<8x8xbf16>, vector<8x8xf32> -> vector<8x8xf32>
    %106 = arith.addf %103, %105 : vector<8x8xf32>
    %107 = tpu.reciprocal %101 {approx = true} : vector<8x1xf32> -> vector<8x1xf32>
    %108 = vector.broadcast %107 : vector<8x1xf32> to vector<8x8xf32>
    %109 = arith.mulf %106, %108 : vector<8x8xf32>
    %110 = arith.truncf %109 : vector<8x8xf32> to vector<8x8xbf16>
    %c1_64 = arith.constant 1 : index
    %c0_65 = arith.constant 0 : index
    %c0_66 = arith.constant 0 : index
    %111 = vector.load %arg10[%c1_64, %c0_65, %c0_66] : memref<4x8x32xbf16, #tpu.memory_space<vmem>>, vector<1x8x32xbf16>
    %112 = vector.shape_cast %111 : vector<1x8x32xbf16> to vector<8x32xbf16>
    %cst_67 = arith.constant dense<0.000000e+00> : vector<8x32xf32>
    %113 = tpu.matmul %110, %112, %cst_67 {dimension_numbers = #tpu.dot_dimension_numbers<[1], [0], [0], [1], [0, 0, 1, 1], [], []>} : vector<8x8xbf16>, vector<8x32xbf16>, vector<8x32xf32> -> vector<8x32xf32>
    %114 = arith.addf %60, %113 : vector<8x32xf32>
    %c2 = arith.constant 2 : index
    %c0_68 = arith.constant 0 : index
    %c0_69 = arith.constant 0 : index
    %115 = vector.load %arg4[%c2, %c0_68, %c0_69] : memref<4x32x8xbf16, #tpu.memory_space<vmem>>, vector<1x32x8xbf16>
    %116 = vector.shape_cast %115 : vector<1x32x8xbf16> to vector<32x8xbf16>
    %cst_70 = arith.constant dense<0.000000e+00> : vector<8x8xf32>
    %117 = tpu.matmul %2, %116, %cst_70 {dimension_numbers = #tpu.dot_dimension_numbers<[1], [0], [0], [1], [0, 0, 1, 1], [], []>} : vector<8x32xbf16>, vector<32x8xbf16>, vector<8x8xf32> -> vector<8x8xf32>
    %c2_71 = arith.constant 2 : index
    %c0_72 = arith.constant 0 : index
    %c0_73 = arith.constant 0 : index
    %118 = vector.load %arg7[%c2_71, %c0_72, %c0_73] : memref<4x1x8xf32, #tpu.memory_space<vmem>>, vector<1x1x8xf32>
    %119 = vector.shape_cast %118 : vector<1x1x8xf32> to vector<1x8xf32>
    %120 = vector.broadcast %119 : vector<1x8xf32> to vector<8x8xf32>
    %121 = arith.addf %117, %120 : vector<8x8xf32>
    %122 = arith.truncf %121 : vector<8x8xf32> to vector<8x8xbf16>
    %c2_74 = arith.constant 2 : index
    %c0_75 = arith.constant 0 : index
    %c0_76 = arith.constant 0 : index
    %123 = vector.load %arg5[%c2_74, %c0_75, %c0_76] : memref<4x32x8xbf16, #tpu.memory_space<vmem>>, vector<1x32x8xbf16>
    %124 = vector.shape_cast %123 : vector<1x32x8xbf16> to vector<32x8xbf16>
    %cst_77 = arith.constant dense<0.000000e+00> : vector<8x8xf32>
    %125 = tpu.matmul %5, %124, %cst_77 {dimension_numbers = #tpu.dot_dimension_numbers<[1], [0], [0], [1], [0, 0, 1, 1], [], []>} : vector<8x32xbf16>, vector<32x8xbf16>, vector<8x8xf32> -> vector<8x8xf32>
    %c2_78 = arith.constant 2 : index
    %c0_79 = arith.constant 0 : index
    %c0_80 = arith.constant 0 : index
    %126 = vector.load %arg8[%c2_78, %c0_79, %c0_80] : memref<4x1x8xf32, #tpu.memory_space<vmem>>, vector<1x1x8xf32>
    %127 = vector.shape_cast %126 : vector<1x1x8xf32> to vector<1x8xf32>
    %128 = vector.broadcast %127 : vector<1x8xf32> to vector<8x8xf32>
    %129 = arith.addf %125, %128 : vector<8x8xf32>
    %130 = arith.truncf %129 : vector<8x8xf32> to vector<8x8xbf16>
    %c2_81 = arith.constant 2 : index
    %c0_82 = arith.constant 0 : index
    %c0_83 = arith.constant 0 : index
    %131 = vector.load %arg6[%c2_81, %c0_82, %c0_83] : memref<4x32x8xbf16, #tpu.memory_space<vmem>>, vector<1x32x8xbf16>
    %132 = vector.shape_cast %131 : vector<1x32x8xbf16> to vector<32x8xbf16>
    %cst_84 = arith.constant dense<0.000000e+00> : vector<8x8xf32>
    %133 = tpu.matmul %5, %132, %cst_84 {dimension_numbers = #tpu.dot_dimension_numbers<[1], [0], [0], [1], [0, 0, 1, 1], [], []>} : vector<8x32xbf16>, vector<32x8xbf16>, vector<8x8xf32> -> vector<8x8xf32>
    %c2_85 = arith.constant 2 : index
    %c0_86 = arith.constant 0 : index
    %c0_87 = arith.constant 0 : index
    %134 = vector.load %arg9[%c2_85, %c0_86, %c0_87] : memref<4x1x8xf32, #tpu.memory_space<vmem>>, vector<1x1x8xf32>
    %135 = vector.shape_cast %134 : vector<1x1x8xf32> to vector<1x8xf32>
    %136 = vector.broadcast %135 : vector<1x8xf32> to vector<8x8xf32>
    %137 = arith.addf %133, %136 : vector<8x8xf32>
    %138 = arith.truncf %137 : vector<8x8xf32> to vector<8x8xbf16>
    %cst_88 = arith.constant 0xFF800000 : f32
    %139 = vector.broadcast %cst_88 : f32 to vector<8x1xf32>
    %cst_89 = arith.constant 0.000000e+00 : f32
    %140 = vector.broadcast %cst_89 : f32 to vector<8x1xf32>
    %cst_90 = arith.constant 0.000000e+00 : f32
    %141 = vector.broadcast %cst_90 : f32 to vector<8x8xf32>
    %142 = tpu.transpose %130, [1, 0] : vector<8x8xbf16> -> vector<8x8xbf16>
    %cst_91 = arith.constant dense<0.000000e+00> : vector<8x8xf32>
    %143 = tpu.matmul %122, %142, %cst_91 {dimension_numbers = #tpu.dot_dimension_numbers<[1], [0], [0], [1], [0, 0, 1, 1], [], []>} : vector<8x8xbf16>, vector<8x8xbf16>, vector<8x8xf32> -> vector<8x8xf32>
    %cst_92 = arith.constant dense<0xFF800000> : vector<8xf32>
    %144 = vector.multi_reduction <maximumf>, %143, %cst_92 [1] : vector<8x8xf32> to vector<8xf32>
    %145 = vector.shape_cast %144 : vector<8xf32> to vector<8x1xf32>
    %146 = arith.maximumf %139, %145 : vector<8x1xf32>
    %147 = arith.subf %139, %146 : vector<8x1xf32>
    %148 = math.exp %147 : vector<8x1xf32>
    %149 = vector.broadcast %146 : vector<8x1xf32> to vector<8x8xf32>
    %150 = arith.subf %143, %149 : vector<8x8xf32>
    %151 = math.exp %150 : vector<8x8xf32>
    %152 = arith.mulf %148, %140 : vector<8x1xf32>
    %cst_93 = arith.constant dense<0.000000e+00> : vector<8xf32>
    %153 = vector.multi_reduction <add>, %151, %cst_93 [1] : vector<8x8xf32> to vector<8xf32>
    %154 = vector.shape_cast %153 : vector<8xf32> to vector<8x1xf32>
    %155 = arith.addf %152, %154 : vector<8x1xf32>
    %156 = vector.broadcast %148 : vector<8x1xf32> to vector<8x8xf32>
    %157 = arith.mulf %156, %141 : vector<8x8xf32>
    %158 = arith.truncf %151 : vector<8x8xf32> to vector<8x8xbf16>
    %cst_94 = arith.constant dense<0.000000e+00> : vector<8x8xf32>
    %159 = tpu.matmul %158, %138, %cst_94 {dimension_numbers = #tpu.dot_dimension_numbers<[1], [0], [0], [1], [0, 0, 1, 1], [], []>} : vector<8x8xbf16>, vector<8x8xbf16>, vector<8x8xf32> -> vector<8x8xf32>
    %160 = arith.addf %157, %159 : vector<8x8xf32>
    %161 = tpu.reciprocal %155 {approx = true} : vector<8x1xf32> -> vector<8x1xf32>
    %162 = vector.broadcast %161 : vector<8x1xf32> to vector<8x8xf32>
    %163 = arith.mulf %160, %162 : vector<8x8xf32>
    %164 = arith.truncf %163 : vector<8x8xf32> to vector<8x8xbf16>
    %c2_95 = arith.constant 2 : index
    %c0_96 = arith.constant 0 : index
    %c0_97 = arith.constant 0 : index
    %165 = vector.load %arg10[%c2_95, %c0_96, %c0_97] : memref<4x8x32xbf16, #tpu.memory_space<vmem>>, vector<1x8x32xbf16>
    %166 = vector.shape_cast %165 : vector<1x8x32xbf16> to vector<8x32xbf16>
    %cst_98 = arith.constant dense<0.000000e+00> : vector<8x32xf32>
    %167 = tpu.matmul %164, %166, %cst_98 {dimension_numbers = #tpu.dot_dimension_numbers<[1], [0], [0], [1], [0, 0, 1, 1], [], []>} : vector<8x8xbf16>, vector<8x32xbf16>, vector<8x32xf32> -> vector<8x32xf32>
    %168 = arith.addf %114, %167 : vector<8x32xf32>
    %c3 = arith.constant 3 : index
    %c0_99 = arith.constant 0 : index
    %c0_100 = arith.constant 0 : index
    %169 = vector.load %arg4[%c3, %c0_99, %c0_100] : memref<4x32x8xbf16, #tpu.memory_space<vmem>>, vector<1x32x8xbf16>
    %170 = vector.shape_cast %169 : vector<1x32x8xbf16> to vector<32x8xbf16>
    %cst_101 = arith.constant dense<0.000000e+00> : vector<8x8xf32>
    %171 = tpu.matmul %2, %170, %cst_101 {dimension_numbers = #tpu.dot_dimension_numbers<[1], [0], [0], [1], [0, 0, 1, 1], [], []>} : vector<8x32xbf16>, vector<32x8xbf16>, vector<8x8xf32> -> vector<8x8xf32>
    %c3_102 = arith.constant 3 : index
    %c0_103 = arith.constant 0 : index
    %c0_104 = arith.constant 0 : index
    %172 = vector.load %arg7[%c3_102, %c0_103, %c0_104] : memref<4x1x8xf32, #tpu.memory_space<vmem>>, vector<1x1x8xf32>
    %173 = vector.shape_cast %172 : vector<1x1x8xf32> to vector<1x8xf32>
    %174 = vector.broadcast %173 : vector<1x8xf32> to vector<8x8xf32>
    %175 = arith.addf %171, %174 : vector<8x8xf32>
    %176 = arith.truncf %175 : vector<8x8xf32> to vector<8x8xbf16>
    %c3_105 = arith.constant 3 : index
    %c0_106 = arith.constant 0 : index
    %c0_107 = arith.constant 0 : index
    %177 = vector.load %arg5[%c3_105, %c0_106, %c0_107] : memref<4x32x8xbf16, #tpu.memory_space<vmem>>, vector<1x32x8xbf16>
    %178 = vector.shape_cast %177 : vector<1x32x8xbf16> to vector<32x8xbf16>
    %cst_108 = arith.constant dense<0.000000e+00> : vector<8x8xf32>
    %179 = tpu.matmul %5, %178, %cst_108 {dimension_numbers = #tpu.dot_dimension_numbers<[1], [0], [0], [1], [0, 0, 1, 1], [], []>} : vector<8x32xbf16>, vector<32x8xbf16>, vector<8x8xf32> -> vector<8x8xf32>
    %c3_109 = arith.constant 3 : index
    %c0_110 = arith.constant 0 : index
    %c0_111 = arith.constant 0 : index
    %180 = vector.load %arg8[%c3_109, %c0_110, %c0_111] : memref<4x1x8xf32, #tpu.memory_space<vmem>>, vector<1x1x8xf32>
    %181 = vector.shape_cast %180 : vector<1x1x8xf32> to vector<1x8xf32>
    %182 = vector.broadcast %181 : vector<1x8xf32> to vector<8x8xf32>
    %183 = arith.addf %179, %182 : vector<8x8xf32>
    %184 = arith.truncf %183 : vector<8x8xf32> to vector<8x8xbf16>
    %c3_112 = arith.constant 3 : index
    %c0_113 = arith.constant 0 : index
    %c0_114 = arith.constant 0 : index
    %185 = vector.load %arg6[%c3_112, %c0_113, %c0_114] : memref<4x32x8xbf16, #tpu.memory_space<vmem>>, vector<1x32x8xbf16>
    %186 = vector.shape_cast %185 : vector<1x32x8xbf16> to vector<32x8xbf16>
    %cst_115 = arith.constant dense<0.000000e+00> : vector<8x8xf32>
    %187 = tpu.matmul %5, %186, %cst_115 {dimension_numbers = #tpu.dot_dimension_numbers<[1], [0], [0], [1], [0, 0, 1, 1], [], []>} : vector<8x32xbf16>, vector<32x8xbf16>, vector<8x8xf32> -> vector<8x8xf32>
    %c3_116 = arith.constant 3 : index
    %c0_117 = arith.constant 0 : index
    %c0_118 = arith.constant 0 : index
    %188 = vector.load %arg9[%c3_116, %c0_117, %c0_118] : memref<4x1x8xf32, #tpu.memory_space<vmem>>, vector<1x1x8xf32>
    %189 = vector.shape_cast %188 : vector<1x1x8xf32> to vector<1x8xf32>
    %190 = vector.broadcast %189 : vector<1x8xf32> to vector<8x8xf32>
    %191 = arith.addf %187, %190 : vector<8x8xf32>
    %192 = arith.truncf %191 : vector<8x8xf32> to vector<8x8xbf16>
    %cst_119 = arith.constant 0xFF800000 : f32
    %193 = vector.broadcast %cst_119 : f32 to vector<8x1xf32>
    %cst_120 = arith.constant 0.000000e+00 : f32
    %194 = vector.broadcast %cst_120 : f32 to vector<8x1xf32>
    %cst_121 = arith.constant 0.000000e+00 : f32
    %195 = vector.broadcast %cst_121 : f32 to vector<8x8xf32>
    %196 = tpu.transpose %184, [1, 0] : vector<8x8xbf16> -> vector<8x8xbf16>
    %cst_122 = arith.constant dense<0.000000e+00> : vector<8x8xf32>
    %197 = tpu.matmul %176, %196, %cst_122 {dimension_numbers = #tpu.dot_dimension_numbers<[1], [0], [0], [1], [0, 0, 1, 1], [], []>} : vector<8x8xbf16>, vector<8x8xbf16>, vector<8x8xf32> -> vector<8x8xf32>
    %cst_123 = arith.constant dense<0xFF800000> : vector<8xf32>
    %198 = vector.multi_reduction <maximumf>, %197, %cst_123 [1] : vector<8x8xf32> to vector<8xf32>
    %199 = vector.shape_cast %198 : vector<8xf32> to vector<8x1xf32>
    %200 = arith.maximumf %193, %199 : vector<8x1xf32>
    %201 = arith.subf %193, %200 : vector<8x1xf32>
    %202 = math.exp %201 : vector<8x1xf32>
    %203 = vector.broadcast %200 : vector<8x1xf32> to vector<8x8xf32>
    %204 = arith.subf %197, %203 : vector<8x8xf32>
    %205 = math.exp %204 : vector<8x8xf32>
    %206 = arith.mulf %202, %194 : vector<8x1xf32>
    %cst_124 = arith.constant dense<0.000000e+00> : vector<8xf32>
    %207 = vector.multi_reduction <add>, %205, %cst_124 [1] : vector<8x8xf32> to vector<8xf32>
    %208 = vector.shape_cast %207 : vector<8xf32> to vector<8x1xf32>
    %209 = arith.addf %206, %208 : vector<8x1xf32>
    %210 = vector.broadcast %202 : vector<8x1xf32> to vector<8x8xf32>
    %211 = arith.mulf %210, %195 : vector<8x8xf32>
    %212 = arith.truncf %205 : vector<8x8xf32> to vector<8x8xbf16>
    %cst_125 = arith.constant dense<0.000000e+00> : vector<8x8xf32>
    %213 = tpu.matmul %212, %192, %cst_125 {dimension_numbers = #tpu.dot_dimension_numbers<[1], [0], [0], [1], [0, 0, 1, 1], [], []>} : vector<8x8xbf16>, vector<8x8xbf16>, vector<8x8xf32> -> vector<8x8xf32>
    %214 = arith.addf %211, %213 : vector<8x8xf32>
    %215 = tpu.reciprocal %209 {approx = true} : vector<8x1xf32> -> vector<8x1xf32>
    %216 = vector.broadcast %215 : vector<8x1xf32> to vector<8x8xf32>
    %217 = arith.mulf %214, %216 : vector<8x8xf32>
    %218 = arith.truncf %217 : vector<8x8xf32> to vector<8x8xbf16>
    %c3_126 = arith.constant 3 : index
    %c0_127 = arith.constant 0 : index
    %c0_128 = arith.constant 0 : index
    %219 = vector.load %arg10[%c3_126, %c0_127, %c0_128] : memref<4x8x32xbf16, #tpu.memory_space<vmem>>, vector<1x8x32xbf16>
    %220 = vector.shape_cast %219 : vector<1x8x32xbf16> to vector<8x32xbf16>
    %cst_129 = arith.constant dense<0.000000e+00> : vector<8x32xf32>
    %221 = tpu.matmul %218, %220, %cst_129 {dimension_numbers = #tpu.dot_dimension_numbers<[1], [0], [0], [1], [0, 0, 1, 1], [], []>} : vector<8x8xbf16>, vector<8x32xbf16>, vector<8x32xf32> -> vector<8x32xf32>
    %222 = arith.addf %168, %221 : vector<8x32xf32>
    %c0_130 = arith.constant 0 : index
    %c0_131 = arith.constant 0 : index
    %223 = vector.load %arg11[%c0_130, %c0_131] : memref<1x32xf32, #tpu.memory_space<vmem>>, vector<1x32xf32>
    %224 = vector.broadcast %223 : vector<1x32xf32> to vector<8x32xf32>
    %225 = arith.addf %222, %224 : vector<8x32xf32>
    %226 = arith.addf %1, %225 : vector<8x32xf32>
    %c0_132 = arith.constant 0 : index
    %c0_133 = arith.constant 0 : index
    %227 = vector.load %arg16[%c0_132, %c0_133] : memref<1x32xf32, #tpu.memory_space<vmem>>, vector<1x32xf32>
    %c0_134 = arith.constant 0 : index
    %c0_135 = arith.constant 0 : index
    %228 = vector.load %arg17[%c0_134, %c0_135] : memref<1x32xf32, #tpu.memory_space<vmem>>, vector<1x32xf32>
    %cst_136 = arith.constant dense<0.000000e+00> : vector<8xf32>
    %229 = vector.multi_reduction <add>, %226, %cst_136 [1] : vector<8x32xf32> to vector<8xf32>
    %230 = vector.shape_cast %229 : vector<8xf32> to vector<8x1xf32>
    %cst_137 = arith.constant 3.200000e+01 : f32
    %231 = vector.broadcast %cst_137 : f32 to vector<8x1xf32>
    %232 = arith.divf %230, %231 : vector<8x1xf32>
    %233 = arith.mulf %226, %226 : vector<8x32xf32>
    %cst_138 = arith.constant dense<0.000000e+00> : vector<8xf32>
    %234 = vector.multi_reduction <add>, %233, %cst_138 [1] : vector<8x32xf32> to vector<8xf32>
    %235 = vector.shape_cast %234 : vector<8xf32> to vector<8x1xf32>
    %cst_139 = arith.constant 3.200000e+01 : f32
    %236 = vector.broadcast %cst_139 : f32 to vector<8x1xf32>
    %237 = arith.divf %235, %236 : vector<8x1xf32>
    %238 = arith.mulf %232, %232 : vector<8x1xf32>
    %239 = arith.subf %237, %238 : vector<8x1xf32>
    %cst_140 = arith.constant 0.000000e+00 : f32
    %240 = vector.broadcast %cst_140 : f32 to vector<8x1xf32>
    %241 = arith.maximumf %239, %240 : vector<8x1xf32>
    %242 = vector.broadcast %232 : vector<8x1xf32> to vector<8x32xf32>
    %243 = arith.subf %226, %242 : vector<8x32xf32>
    %cst_141 = arith.constant 9.99999974E-6 : f32
    %244 = vector.broadcast %cst_141 : f32 to vector<8x1xf32>
    %245 = arith.addf %241, %244 : vector<8x1xf32>
    %246 = math.rsqrt %245 : vector<8x1xf32>
    %247 = vector.broadcast %246 : vector<8x1xf32> to vector<8x32xf32>
    %248 = arith.mulf %243, %247 : vector<8x32xf32>
    %249 = vector.broadcast %227 : vector<1x32xf32> to vector<8x32xf32>
    %250 = arith.mulf %248, %249 : vector<8x32xf32>
    %251 = vector.broadcast %228 : vector<1x32xf32> to vector<8x32xf32>
    %252 = arith.addf %250, %251 : vector<8x32xf32>
    %253 = arith.truncf %252 : vector<8x32xf32> to vector<8x32xbf16>
    %c0_142 = arith.constant 0 : index
    %c0_143 = arith.constant 0 : index
    %254 = vector.load %arg12[%c0_142, %c0_143] : memref<32x64xbf16, #tpu.memory_space<vmem>>, vector<32x64xbf16>
    %cst_144 = arith.constant dense<0.000000e+00> : vector<8x64xf32>
    %255 = tpu.matmul %253, %254, %cst_144 {dimension_numbers = #tpu.dot_dimension_numbers<[1], [0], [0], [1], [0, 0, 1, 1], [], []>} : vector<8x32xbf16>, vector<32x64xbf16>, vector<8x64xf32> -> vector<8x64xf32>
    %c0_145 = arith.constant 0 : index
    %c0_146 = arith.constant 0 : index
    %256 = vector.load %arg13[%c0_145, %c0_146] : memref<1x64xf32, #tpu.memory_space<vmem>>, vector<1x64xf32>
    %257 = vector.broadcast %256 : vector<1x64xf32> to vector<8x64xf32>
    %258 = arith.addf %255, %257 : vector<8x64xf32>
    %cst_147 = arith.constant 0.000000e+00 : f32
    %259 = vector.broadcast %cst_147 : f32 to vector<8x64xf32>
    %260 = arith.maximumf %258, %259 : vector<8x64xf32>
    %261 = arith.truncf %260 : vector<8x64xf32> to vector<8x64xbf16>
    %c0_148 = arith.constant 0 : index
    %c0_149 = arith.constant 0 : index
    %262 = vector.load %arg14[%c0_148, %c0_149] : memref<64x32xbf16, #tpu.memory_space<vmem>>, vector<64x32xbf16>
    %cst_150 = arith.constant dense<0.000000e+00> : vector<8x32xf32>
    %263 = tpu.matmul %261, %262, %cst_150 {dimension_numbers = #tpu.dot_dimension_numbers<[1], [0], [0], [1], [0, 0, 1, 1], [], []>} : vector<8x64xbf16>, vector<64x32xbf16>, vector<8x32xf32> -> vector<8x32xf32>
    %c0_151 = arith.constant 0 : index
    %c0_152 = arith.constant 0 : index
    %264 = vector.load %arg15[%c0_151, %c0_152] : memref<1x32xf32, #tpu.memory_space<vmem>>, vector<1x32xf32>
    %265 = vector.broadcast %264 : vector<1x32xf32> to vector<8x32xf32>
    %266 = arith.addf %263, %265 : vector<8x32xf32>
    %267 = arith.addf %252, %266 : vector<8x32xf32>
    %c0_153 = arith.constant 0 : index
    %c0_154 = arith.constant 0 : index
    %268 = vector.load %arg18[%c0_153, %c0_154] : memref<1x32xf32, #tpu.memory_space<vmem>>, vector<1x32xf32>
    %c0_155 = arith.constant 0 : index
    %c0_156 = arith.constant 0 : index
    %269 = vector.load %arg19[%c0_155, %c0_156] : memref<1x32xf32, #tpu.memory_space<vmem>>, vector<1x32xf32>
    %cst_157 = arith.constant dense<0.000000e+00> : vector<8xf32>
    %270 = vector.multi_reduction <add>, %267, %cst_157 [1] : vector<8x32xf32> to vector<8xf32>
    %271 = vector.shape_cast %270 : vector<8xf32> to vector<8x1xf32>
    %cst_158 = arith.constant 3.200000e+01 : f32
    %272 = vector.broadcast %cst_158 : f32 to vector<8x1xf32>
    %273 = arith.divf %271, %272 : vector<8x1xf32>
    %274 = arith.mulf %267, %267 : vector<8x32xf32>
    %cst_159 = arith.constant dense<0.000000e+00> : vector<8xf32>
    %275 = vector.multi_reduction <add>, %274, %cst_159 [1] : vector<8x32xf32> to vector<8xf32>
    %276 = vector.shape_cast %275 : vector<8xf32> to vector<8x1xf32>
    %cst_160 = arith.constant 3.200000e+01 : f32
    %277 = vector.broadcast %cst_160 : f32 to vector<8x1xf32>
    %278 = arith.divf %276, %277 : vector<8x1xf32>
    %279 = arith.mulf %273, %273 : vector<8x1xf32>
    %280 = arith.subf %278, %279 : vector<8x1xf32>
    %cst_161 = arith.constant 0.000000e+00 : f32
    %281 = vector.broadcast %cst_161 : f32 to vector<8x1xf32>
    %282 = arith.maximumf %280, %281 : vector<8x1xf32>
    %283 = vector.broadcast %273 : vector<8x1xf32> to vector<8x32xf32>
    %284 = arith.subf %267, %283 : vector<8x32xf32>
    %cst_162 = arith.constant 9.99999974E-6 : f32
    %285 = vector.broadcast %cst_162 : f32 to vector<8x1xf32>
    %286 = arith.addf %282, %285 : vector<8x1xf32>
    %287 = math.rsqrt %286 : vector<8x1xf32>
    %288 = vector.broadcast %287 : vector<8x1xf32> to vector<8x32xf32>
    %289 = arith.mulf %284, %288 : vector<8x32xf32>
    %290 = vector.broadcast %268 : vector<1x32xf32> to vector<8x32xf32>
    %291 = arith.mulf %289, %290 : vector<8x32xf32>
    %292 = vector.broadcast %269 : vector<1x32xf32> to vector<8x32xf32>
    %293 = arith.addf %291, %292 : vector<8x32xf32>
    %c0_163 = arith.constant 0 : index
    %c0_164 = arith.constant 0 : index
    %c0_165 = arith.constant 0 : index
    %294 = vector.load %arg20[%c0_163, %c0_164, %c0_165] : memref<1x8x32xf32, #tpu.memory_space<vmem>>, vector<1x8x32xf32>
    %295 = vector.shape_cast %294 : vector<1x8x32xf32> to vector<8x32xf32>
    %296 = vector.shape_cast %293 : vector<8x32xf32> to vector<1x8x32xf32>
    tpu.vector_store %arg20[%c0_163, %c0_164, %c0_165], %296 {strides = array<i32>} : memref<1x8x32xf32, #tpu.memory_space<vmem>>, vector<1x8x32xf32>,
    return
  }
  func.func @transform_0(%arg0: i32, %arg1: i32) -> (i32, i32, i32) {
    %c0_i32 = arith.constant 0 : i32
    %c0_i32_0 = arith.constant 0 : i32
    return %arg0, %arg1, %c0_i32 : i32, i32, i32
  }
  func.func @transform_1(%arg0: i32, %arg1: i32) -> (i32, i32, i32) {
    %c0_i32 = arith.constant 0 : i32
    %c0_i32_0 = arith.constant 0 : i32
    %c0_i32_1 = arith.constant 0 : i32
    return %arg0, %c0_i32, %c0_i32_0 : i32, i32, i32
  }
  func.func @transform_2(%arg0: i32, %arg1: i32) -> (i32, i32, i32) {
    %c0_i32 = arith.constant 0 : i32
    %c0_i32_0 = arith.constant 0 : i32
    %c0_i32_1 = arith.constant 0 : i32
    %c0_i32_2 = arith.constant 0 : i32
    return %c0_i32, %c0_i32_0, %c0_i32_1 : i32, i32, i32
  }
  func.func @transform_3(%arg0: i32, %arg1: i32) -> (i32, i32, i32) {
    %c0_i32 = arith.constant 0 : i32
    %c0_i32_0 = arith.constant 0 : i32
    %c0_i32_1 = arith.constant 0 : i32
    %c0_i32_2 = arith.constant 0 : i32
    return %c0_i32, %c0_i32_0, %c0_i32_1 : i32, i32, i32
  }
  func.func @transform_4(%arg0: i32, %arg1: i32) -> (i32, i32, i32) {
    %c0_i32 = arith.constant 0 : i32
    %c0_i32_0 = arith.constant 0 : i32
    %c0_i32_1 = arith.constant 0 : i32
    %c0_i32_2 = arith.constant 0 : i32
    return %c0_i32, %c0_i32_0, %c0_i32_1 : i32, i32, i32
  }
  func.func @transform_5(%arg0: i32, %arg1: i32) -> (i32, i32, i32) {
    %c0_i32 = arith.constant 0 : i32
    %c0_i32_0 = arith.constant 0 : i32
    %c0_i32_1 = arith.constant 0 : i32
    %c0_i32_2 = arith.constant 0 : i32
    return %c0_i32, %c0_i32_0, %c0_i32_1 : i32, i32, i32
  }
  func.func @transform_6(%arg0: i32, %arg1: i32) -> (i32, i32, i32) {
    %c0_i32 = arith.constant 0 : i32
    %c0_i32_0 = arith.constant 0 : i32
    %c0_i32_1 = arith.constant 0 : i32
    %c0_i32_2 = arith.constant 0 : i32
    return %c0_i32, %c0_i32_0, %c0_i32_1 : i32, i32, i32
  }
  func.func @transform_7(%arg0: i32, %arg1: i32) -> (i32, i32, i32) {
    %c0_i32 = arith.constant 0 : i32
    %c0_i32_0 = arith.constant 0 : i32
    %c0_i32_1 = arith.constant 0 : i32
    %c0_i32_2 = arith.constant 0 : i32
    return %c0_i32, %c0_i32_0, %c0_i32_1 : i32, i32, i32
  }
  func.func @transform_8(%arg0: i32, %arg1: i32) -> (i32, i32, i32) {
    %c0_i32 = arith.constant 0 : i32
    %c0_i32_0 = arith.constant 0 : i32
    %c0_i32_1 = arith.constant 0 : i32
    %c0_i32_2 = arith.constant 0 : i32
    return %c0_i32, %c0_i32_0, %c0_i32_1 : i32, i32, i32
  }
  func.func @transform_9(%arg0: i32, %arg1: i32) -> (i32, i32) {
    %c0_i32 = arith.constant 0 : i32
    %c0_i32_0 = arith.constant 0 : i32
    %c0_i32_1 = arith.constant 0 : i32
    return %c0_i32, %c0_i32_0 : i32, i32
  }
  func.func @transform_10(%arg0: i32, %arg1: i32) -> (i32, i32) {
    %c0_i32 = arith.constant 0 : i32
    %c0_i32_0 = arith.constant 0 : i32
    %c0_i32_1 = arith.constant 0 : i32
    return %c0_i32, %c0_i32_0 : i32, i32
  }
  func.func @transform_11(%arg0: i32, %arg1: i32) -> (i32, i32) {
    %c0_i32 = arith.constant 0 : i32
    %c0_i32_0 = arith.constant 0 : i32
    %c0_i32_1 = arith.constant 0 : i32
    return %c0_i32, %c0_i32_0 : i32, i32
  }
  func.func @transform_12(%arg0: i32, %arg1: i32) -> (i32, i32) {
    %c0_i32 = arith.constant 0 : i32
    %c0_i32_0 = arith.constant 0 : i32
    %c0_i32_1 = arith.constant 0 : i32
    return %c0_i32, %c0_i32_0 : i32, i32
  }
  func.func @transform_13(%arg0: i32, %arg1: i32) -> (i32, i32) {
    %c0_i32 = arith.constant 0 : i32
    %c0_i32_0 = arith.constant 0 : i32
    %c0_i32_1 = arith.constant 0 : i32
    return %c0_i32, %c0_i32_0 : i32, i32
  }
  func.func @transform_14(%arg0: i32, %arg1: i32) -> (i32, i32) {
    %c0_i32 = arith.constant 0 : i32
    %c0_i32_0 = arith.constant 0 : i32
    %c0_i32_1 = arith.constant 0 : i32
    return %c0_i32, %c0_i32_0 : i32, i32
  }
  func.func @transform_15(%arg0: i32, %arg1: i32) -> (i32, i32) {
    %c0_i32 = arith.constant 0 : i32
    %c0_i32_0 = arith.constant 0 : i32
    %c0_i32_1 = arith.constant 0 : i32
    return %c0_i32, %c0_i32_0 : i32, i32
  }
  func.func @transform_16(%arg0: i32, %arg1: i32) -> (i32, i32) {
    %c0_i32 = arith.constant 0 : i32
    %c0_i32_0 = arith.constant 0 : i32
    %c0_i32_1 = arith.constant 0 : i32
    return %c0_i32, %c0_i32_0 : i32, i32
  }
  func.func @transform_17(%arg0: i32, %arg1: i32) -> (i32, i32) {
    %c0_i32 = arith.constant 0 : i32
    %c0_i32_0 = arith.constant 0 : i32
    %c0_i32_1 = arith.constant 0 : i32
    return %c0_i32, %c0_i32_0 : i32, i32
  }
  func.func @transform_18(%arg0: i32, %arg1: i32) -> (i32, i32, i32) {
    %c0_i32 = arith.constant 0 : i32
    %c0_i32_0 = arith.constant 0 : i32
    return %arg0, %arg1, %c0_i32 : i32, i32, i32
  }
}

</mosaic_0001>

<llo_original>
// kernel: tpu_custom_call.1
$region0: #{tpu_custom_call.1}
  #allocation0 [shape = 'u32[]', space=smem, size = 0x4, offset = 0x4, fixed_abs, tag = 'smem constant byte address 0x4 - core index']
  #allocation1 [shape = 'u32[72,128]{1,0:T(1,128)}', space=vmem, size = 0x9000, scoped, tag = 'internal scratch']
  %s0 = inlined_call_operand.vmem [shape: f32[2,8,32], index: 0, kind: input, shape index: {}]
  %s1 = inlined_call_operand.vmem [shape: f32[2,8,32], index: 1, kind: input, shape index: {}]
  %s2 = inlined_call_operand.vmem [shape: bf16[4,32,8], index: 2, kind: input, shape index: {}]
  %s3 = inlined_call_operand.vmem [shape: bf16[4,32,8], index: 3, kind: input, shape index: {}]
  %s4 = inlined_call_operand.vmem [shape: bf16[4,32,8], index: 4, kind: input, shape index: {}]
  %s5 = inlined_call_operand.vmem [shape: f32[4,1,8], index: 5, kind: input, shape index: {}]
  %s6 = inlined_call_operand.vmem [shape: f32[4,1,8], index: 6, kind: input, shape index: {}]
  %s7 = inlined_call_operand.vmem [shape: f32[4,1,8], index: 7, kind: input, shape index: {}]
  %s8 = inlined_call_operand.vmem [shape: bf16[4,8,32], index: 8, kind: input, shape index: {}]
  %s9 = inlined_call_operand.vmem [shape: f32[1,32], index: 9, kind: input, shape index: {}]
  %s10 = inlined_call_operand.vmem [shape: bf16[32,64], index: 10, kind: input, shape index: {}]
  %s11 = inlined_call_operand.vmem [shape: f32[1,64], index: 11, kind: input, shape index: {}]
  %s12 = inlined_call_operand.vmem [shape: bf16[64,32], index: 12, kind: input, shape index: {}]
  %s13 = inlined_call_operand.vmem [shape: f32[1,32], index: 13, kind: input, shape index: {}]
  %s14 = inlined_call_operand.vmem [shape: f32[1,32], index: 14, kind: input, shape index: {}]
  %s15 = inlined_call_operand.vmem [shape: f32[1,32], index: 15, kind: input, shape index: {}]
  %s16 = inlined_call_operand.vmem [shape: f32[1,32], index: 16, kind: input, shape index: {}]
  %s17 = inlined_call_operand.vmem [shape: f32[1,32], index: 17, kind: input, shape index: {}]
  %s18 = inlined_call_operand.hbm [shape: f32[2,8,32], index: 18, kind: output, shape index: {}]
  %s19 = sld [smem:[#allocation0]]
  $region105: #{tpu_custom_call.1} parent=0
    _
  %s21 = ssub.s32 1, %s19
  %s22 = scalar_select 0, %s21, %s19
  $region1: #{tpu_custom_call.1} parent=0
    #allocation2 [shape = 'u8[8192]{0}', space=vmem, size = 0x2000, scoped, tag = 'output window, operand 0']
    #allocation3 [shape = 's32[2]{0}', space=sflag, size = 0x8, scoped, tag = 'scoped memory for tpu_custom_call.1']
    %23 = vsyncpa [#allocation3], 0
    %s24 = scalar_lea.sflag [#allocation3], 1
    %25 = vsyncpa %s24, 0
    loop: start=0, step=1, limit=4
    $region2: #{tpu_custom_call.1} parent=1 // loop_pre_header
      _
    $region3: #{tpu_custom_call.1} parent=1 // loop_header
      %s27 = sphi 0, %s31
      %p28 = scmp.ge.s32.totalorder %s27, 4
      %s34 = sphi 0, %s46
      %s35 = sphi 0, %s42
      %s36 = sphi 0, %s34
      %s37 = sphi 0, %s35
      %s38 = sphi 0, %s36
      %s39 = sphi 0, %s37
      %s51 = sphi 0, %s53
      %s54 = sphi 0, %s51
      %s55 = sphi 0, %s54
      %s71 = sphi 0, %s55
      %s77 = sphi 0, %s79
      %s80 = sphi 0, %s77
      %s81 = sphi 0, %s80
      %s97 = sphi 0, %s81
      %s101 = sphi 0, %s101
      %s103 = sphi 0, %s101
      %s104 = sphi 0, %s103
      %s118 = sphi 0, %s104
      %s122 = sphi 0, %s122
      %s124 = sphi 0, %s122
      %s125 = sphi 0, %s124
      %s139 = sphi 0, %s125
      %s143 = sphi 0, %s143
      %s145 = sphi 0, %s143
      %s146 = sphi 0, %s145
      %s160 = sphi 0, %s146
      %s164 = sphi 0, %s164
      %s166 = sphi 0, %s164
      %s167 = sphi 0, %s166
      %s181 = sphi 0, %s167
      %s185 = sphi 0, %s185
      %s187 = sphi 0, %s185
      %s188 = sphi 0, %s187
      %s202 = sphi 0, %s188
      %s206 = sphi 0, %s206
      %s208 = sphi 0, %s206
      %s209 = sphi 0, %s208
      %s223 = sphi 0, %s209
      %s227 = sphi 0, %s227
      %s229 = sphi 0, %s227
      %s230 = sphi 0, %s229
      %s244 = sphi 0, %s230
      %s248 = sphi 0, %s248
      %s250 = sphi 0, %s248
      %s251 = sphi 0, %s250
      %s265 = sphi 0, %s251
      %s269 = sphi 0, %s269
      %s271 = sphi 0, %s269
      %s272 = sphi 0, %s271
      %s286 = sphi 0, %s272
      %s290 = sphi 0, %s290
      %s292 = sphi 0, %s290
      %s293 = sphi 0, %s292
      %s307 = sphi 0, %s293
      %s311 = sphi 0, %s311
      %s313 = sphi 0, %s311
      %s314 = sphi 0, %s313
      %s328 = sphi 0, %s314
      %s332 = sphi 0, %s332
      %s334 = sphi 0, %s332
      %s335 = sphi 0, %s334
      %s349 = sphi 0, %s335
      %s353 = sphi 0, %s353
      %s355 = sphi 0, %s353
      %s356 = sphi 0, %s355
      %s370 = sphi 0, %s356
      %s374 = sphi 0, %s374
      %s376 = sphi 0, %s374
      %s377 = sphi 0, %s376
      %s391 = sphi 0, %s377
      %s395 = sphi 0, %s395
      %s397 = sphi 0, %s395
      %s398 = sphi 0, %s397
      %s412 = sphi 0, %s398
      %s416 = sphi 0, %s416
      %s418 = sphi 0, %s416
      %s419 = sphi 0, %s418
      %s433 = sphi 0, %s419
      %s441 = sphi 0, %s443
      %s444 = sphi 0, %s441
      %s445 = sphi 0, %s444
      %s461 = sphi 0, %s445
    $region4: #{tpu_custom_call.1} parent=1 // loop_header_branch
      %30 = sbr.rel (%p28) target = $region8
    $region5: #{tpu_custom_call.1} parent=1 // loop_body
      %s32 = ssub.s32 %s27, 1
      %s33 = ssub.s32 %s27, 2
      %s40 = sadd.s32 1, %s35
      %p41 = scmp.ge.s32.totalorder %s40, 1
      %s42 = scalar_select %p41, 0, %s40
      %s43 = sadd.s32 1, %s34
      %s44 = scalar_select %p41, %s43, %s34
      %p45 = scmp.ge.s32.totalorder %s44, 2
      %s46 = scalar_select %p45, 0, %s44
      %s47 = ssub.s32 %s34, %s46
      %s48 = ssub.s32 %s35, %s42
      %s49 = sor.u32 %s47, %s48
      %p50 = scmp.eq.s32.totalorder %s49, 0
      %s52 = sadd.s32 %s51, 1
      %s53 = scalar_select %p50, %s51, %s52
      %p56 = pneg %p50
      %p57 = scmp.eq.s32.totalorder %s27, 1
      %p58 = por %p56, %p57
      %p59 = scmp.ne.s32.totalorder %s51, %s54
      %p60 = scmp.eq.s32.totalorder %s27, 0
      %p61 = por %p59, %p60
      %p62 = scmp.ne.s32.totalorder %s51, %s54
      %p63 = scmp.eq.s32.totalorder %s32, 1
      %p64 = por %p62, %p63
      %p65 = scmp.ne.s32.totalorder %s54, %s55
      %p66 = scmp.eq.s32.totalorder %s32, 0
      %p67 = por %p65, %p66
      %p68 = scmp.ne.s32.totalorder %s54, %s55
      %p69 = scmp.eq.s32.totalorder %s33, 1
      %p70 = por %p68, %p69
      %p72 = scmp.ne.s32.totalorder %s55, %s71
      %p73 = scmp.eq.s32.totalorder %s33, 0
      %p74 = por %p72, %p73
      %s75 = ssub.s32 %s34, %s46
      %p76 = scmp.eq.s32.totalorder %s75, 0
      %s78 = sadd.s32 %s77, 1
      %s79 = scalar_select %p76, %s77, %s78
      %p82 = pneg %p76
      %p83 = scmp.eq.s32.totalorder %s27, 1
      %p84 = por %p82, %p83
      %p85 = scmp.ne.s32.totalorder %s77, %s80
      %p86 = scmp.eq.s32.totalorder %s27, 0
      %p87 = por %p85, %p86
      %p88 = scmp.ne.s32.totalorder %s77, %s80
      %p89 = scmp.eq.s32.totalorder %s32, 1
      %p90 = por %p88, %p89
      %p91 = scmp.ne.s32.totalorder %s80, %s81
      %p92 = scmp.eq.s32.totalorder %s32, 0
      %p93 = por %p91, %p92
      %p94 = scmp.ne.s32.totalorder %s80, %s81
      %p95 = scmp.eq.s32.totalorder %s33, 1
      %p96 = por %p94, %p95
      %p98 = scmp.ne.s32.totalorder %s81, %s97
      %p99 = scmp.eq.s32.totalorder %s33, 0
      %p100 = por %p98, %p99
      %s102 = sadd.s32 %s101, 1
      %p105 = scmp.eq.s32.totalorder %s27, 1
      %p106 = scmp.ne.s32.totalorder %s101, %s103
      %p107 = scmp.eq.s32.totalorder %s27, 0
      %p108 = por %p106, %p107
      %p109 = scmp.ne.s32.totalorder %s101, %s103
      %p110 = scmp.eq.s32.totalorder %s32, 1
      %p111 = por %p109, %p110
      %p112 = scmp.ne.s32.totalorder %s103, %s104
      %p113 = scmp.eq.s32.totalorder %s32, 0
      %p114 = por %p112, %p113
      %p115 = scmp.ne.s32.totalorder %s103, %s104
      %p116 = scmp.eq.s32.totalorder %s33, 1
      %p117 = por %p115, %p116
      %p119 = scmp.ne.s32.totalorder %s104, %s118
      %p120 = scmp.eq.s32.totalorder %s33, 0
      %p121 = por %p119, %p120
      %s123 = sadd.s32 %s122, 1
      %p126 = scmp.eq.s32.totalorder %s27, 1
      %p127 = scmp.ne.s32.totalorder %s122, %s124
      %p128 = scmp.eq.s32.totalorder %s27, 0
      %p129 = por %p127, %p128
      %p130 = scmp.ne.s32.totalorder %s122, %s124
      %p131 = scmp.eq.s32.totalorder %s32, 1
      %p132 = por %p130, %p131
      %p133 = scmp.ne.s32.totalorder %s124, %s125
      %p134 = scmp.eq.s32.totalorder %s32, 0
      %p135 = por %p133, %p134
      %p136 = scmp.ne.s32.totalorder %s124, %s125
      %p137 = scmp.eq.s32.totalorder %s33, 1
      %p138 = por %p136, %p137
      %p140 = scmp.ne.s32.totalorder %s125, %s139
      %p141 = scmp.eq.s32.totalorder %s33, 0
      %p142 = por %p140, %p141
      %s144 = sadd.s32 %s143, 1
      %p147 = scmp.eq.s32.totalorder %s27, 1
      %p148 = scmp.ne.s32.totalorder %s143, %s145
      %p149 = scmp.eq.s32.totalorder %s27, 0
      %p150 = por %p148, %p149
      %p151 = scmp.ne.s32.totalorder %s143, %s145
      %p152 = scmp.eq.s32.totalorder %s32, 1
      %p153 = por %p151, %p152
      %p154 = scmp.ne.s32.totalorder %s145, %s146
      %p155 = scmp.eq.s32.totalorder %s32, 0
      %p156 = por %p154, %p155
      %p157 = scmp.ne.s32.totalorder %s145, %s146
      %p158 = scmp.eq.s32.totalorder %s33, 1
      %p159 = por %p157, %p158
      %p161 = scmp.ne.s32.totalorder %s146, %s160
      %p162 = scmp.eq.s32.totalorder %s33, 0
      %p163 = por %p161, %p162
      %s165 = sadd.s32 %s164, 1
      %p168 = scmp.eq.s32.totalorder %s27, 1
      %p169 = scmp.ne.s32.totalorder %s164, %s166
      %p170 = scmp.eq.s32.totalorder %s27, 0
      %p171 = por %p169, %p170
      %p172 = scmp.ne.s32.totalorder %s164, %s166
      %p173 = scmp.eq.s32.totalorder %s32, 1
      %p174 = por %p172, %p173
      %p175 = scmp.ne.s32.totalorder %s166, %s167
      %p176 = scmp.eq.s32.totalorder %s32, 0
      %p177 = por %p175, %p176
      %p178 = scmp.ne.s32.totalorder %s166, %s167
      %p179 = scmp.eq.s32.totalorder %s33, 1
      %p180 = por %p178, %p179
      %p182 = scmp.ne.s32.totalorder %s167, %s181
      %p183 = scmp.eq.s32.totalorder %s33, 0
      %p184 = por %p182, %p183
      %s186 = sadd.s32 %s185, 1
      %p189 = scmp.eq.s32.totalorder %s27, 1
      %p190 = scmp.ne.s32.totalorder %s185, %s187
      %p191 = scmp.eq.s32.totalorder %s27, 0
      %p192 = por %p190, %p191
      %p193 = scmp.ne.s32.totalorder %s185, %s187
      %p194 = scmp.eq.s32.totalorder %s32, 1
      %p195 = por %p193, %p194
      %p196 = scmp.ne.s32.totalorder %s187, %s188
      %p197 = scmp.eq.s32.totalorder %s32, 0
      %p198 = por %p196, %p197
      %p199 = scmp.ne.s32.totalorder %s187, %s188
      %p200 = scmp.eq.s32.totalorder %s33, 1
      %p201 = por %p199, %p200
      %p203 = scmp.ne.s32.totalorder %s188, %s202
      %p204 = scmp.eq.s32.totalorder %s33, 0
      %p205 = por %p203, %p204
      %s207 = sadd.s32 %s206, 1
      %p210 = scmp.eq.s32.totalorder %s27, 1
      %p211 = scmp.ne.s32.totalorder %s206, %s208
      %p212 = scmp.eq.s32.totalorder %s27, 0
      %p213 = por %p211, %p212
      %p214 = scmp.ne.s32.totalorder %s206, %s208
      %p215 = scmp.eq.s32.totalorder %s32, 1
      %p216 = por %p214, %p215
      %p217 = scmp.ne.s32.totalorder %s208, %s209
      %p218 = scmp.eq.s32.totalorder %s32, 0
      %p219 = por %p217, %p218
      %p220 = scmp.ne.s32.totalorder %s208, %s209
      %p221 = scmp.eq.s32.totalorder %s33, 1
      %p222 = por %p220, %p221
      %p224 = scmp.ne.s32.totalorder %s209, %s223
      %p225 = scmp.eq.s32.totalorder %s33, 0
      %p226 = por %p224, %p225
      %s228 = sadd.s32 %s227, 1
      %p231 = scmp.eq.s32.totalorder %s27, 1
      %p232 = scmp.ne.s32.totalorder %s227, %s229
      %p233 = scmp.eq.s32.totalorder %s27, 0
      %p234 = por %p232, %p233
      %p235 = scmp.ne.s32.totalorder %s227, %s229
      %p236 = scmp.eq.s32.totalorder %s32, 1
      %p237 = por %p235, %p236
      %p238 = scmp.ne.s32.totalorder %s229, %s230
      %p239 = scmp.eq.s32.totalorder %s32, 0
      %p240 = por %p238, %p239
      %p241 = scmp.ne.s32.totalorder %s229, %s230
      %p242 = scmp.eq.s32.totalorder %s33, 1
      %p243 = por %p241, %p242
      %p245 = scmp.ne.s32.totalorder %s230, %s244
      %p246 = scmp.eq.s32.totalorder %s33, 0
      %p247 = por %p245, %p246
      %s249 = sadd.s32 %s248, 1
      %p252 = scmp.eq.s32.totalorder %s27, 1
      %p253 = scmp.ne.s32.totalorder %s248, %s250
      %p254 = scmp.eq.s32.totalorder %s27, 0
      %p255 = por %p253, %p254
      %p256 = scmp.ne.s32.totalorder %s248, %s250
      %p257 = scmp.eq.s32.totalorder %s32, 1
      %p258 = por %p256, %p257
      %p259 = scmp.ne.s32.totalorder %s250, %s251
      %p260 = scmp.eq.s32.totalorder %s32, 0
      %p261 = por %p259, %p260
      %p262 = scmp.ne.s32.totalorder %s250, %s251
      %p263 = scmp.eq.s32.totalorder %s33, 1
      %p264 = por %p262, %p263
      %p266 = scmp.ne.s32.totalorder %s251, %s265
      %p267 = scmp.eq.s32.totalorder %s33, 0
      %p268 = por %p266, %p267
      %s270 = sadd.s32 %s269, 1
      %p273 = scmp.eq.s32.totalorder %s27, 1
      %p274 = scmp.ne.s32.totalorder %s269, %s271
      %p275 = scmp.eq.s32.totalorder %s27, 0
      %p276 = por %p274, %p275
      %p277 = scmp.ne.s32.totalorder %s269, %s271
      %p278 = scmp.eq.s32.totalorder %s32, 1
      %p279 = por %p277, %p278
      %p280 = scmp.ne.s32.totalorder %s271, %s272
      %p281 = scmp.eq.s32.totalorder %s32, 0
      %p282 = por %p280, %p281
      %p283 = scmp.ne.s32.totalorder %s271, %s272
      %p284 = scmp.eq.s32.totalorder %s33, 1
      %p285 = por %p283, %p284
      %p287 = scmp.ne.s32.totalorder %s272, %s286
      %p288 = scmp.eq.s32.totalorder %s33, 0
      %p289 = por %p287, %p288
      %s291 = sadd.s32 %s290, 1
      %p294 = scmp.eq.s32.totalorder %s27, 1
      %p295 = scmp.ne.s32.totalorder %s290, %s292
      %p296 = scmp.eq.s32.totalorder %s27, 0
      %p297 = por %p295, %p296
      %p298 = scmp.ne.s32.totalorder %s290, %s292
      %p299 = scmp.eq.s32.totalorder %s32, 1
      %p300 = por %p298, %p299
      %p301 = scmp.ne.s32.totalorder %s292, %s293
      %p302 = scmp.eq.s32.totalorder %s32, 0
      %p303 = por %p301, %p302
      %p304 = scmp.ne.s32.totalorder %s292, %s293
      %p305 = scmp.eq.s32.totalorder %s33, 1
      %p306 = por %p304, %p305
      %p308 = scmp.ne.s32.totalorder %s293, %s307
      %p309 = scmp.eq.s32.totalorder %s33, 0
      %p310 = por %p308, %p309
      %s312 = sadd.s32 %s311, 1
      %p315 = scmp.eq.s32.totalorder %s27, 1
      %p316 = scmp.ne.s32.totalorder %s311, %s313
      %p317 = scmp.eq.s32.totalorder %s27, 0
      %p318 = por %p316, %p317
      %p319 = scmp.ne.s32.totalorder %s311, %s313
      %p320 = scmp.eq.s32.totalorder %s32, 1
      %p321 = por %p319, %p320
      %p322 = scmp.ne.s32.totalorder %s313, %s314
      %p323 = scmp.eq.s32.totalorder %s32, 0
      %p324 = por %p322, %p323
      %p325 = scmp.ne.s32.totalorder %s313, %s314
      %p326 = scmp.eq.s32.totalorder %s33, 1
      %p327 = por %p325, %p326
      %p329 = scmp.ne.s32.totalorder %s314, %s328
      %p330 = scmp.eq.s32.totalorder %s33, 0
      %p331 = por %p329, %p330
      %s333 = sadd.s32 %s332, 1
      %p336 = scmp.eq.s32.totalorder %s27, 1
      %p337 = scmp.ne.s32.totalorder %s332, %s334
      %p338 = scmp.eq.s32.totalorder %s27, 0
      %p339 = por %p337, %p338
      %p340 = scmp.ne.s32.totalorder %s332, %s334
      %p341 = scmp.eq.s32.totalorder %s32, 1
      %p342 = por %p340, %p341
      %p343 = scmp.ne.s32.totalorder %s334, %s335
      %p344 = scmp.eq.s32.totalorder %s32, 0
      %p345 = por %p343, %p344
      %p346 = scmp.ne.s32.totalorder %s334, %s335
      %p347 = scmp.eq.s32.totalorder %s33, 1
      %p348 = por %p346, %p347
      %p350 = scmp.ne.s32.totalorder %s335, %s349
      %p351 = scmp.eq.s32.totalorder %s33, 0
      %p352 = por %p350, %p351
      %s354 = sadd.s32 %s353, 1
      %p357 = scmp.eq.s32.totalorder %s27, 1
      %p358 = scmp.ne.s32.totalorder %s353, %s355
      %p359 = scmp.eq.s32.totalorder %s27, 0
      %p360 = por %p358, %p359
      %p361 = scmp.ne.s32.totalorder %s353, %s355
      %p362 = scmp.eq.s32.totalorder %s32, 1
      %p363 = por %p361, %p362
      %p364 = scmp.ne.s32.totalorder %s355, %s356
      %p365 = scmp.eq.s32.totalorder %s32, 0
      %p366 = por %p364, %p365
      %p367 = scmp.ne.s32.totalorder %s355, %s356
      %p368 = scmp.eq.s32.totalorder %s33, 1
      %p369 = por %p367, %p368
      %p371 = scmp.ne.s32.totalorder %s356, %s370
      %p372 = scmp.eq.s32.totalorder %s33, 0
      %p373 = por %p371, %p372
      %s375 = sadd.s32 %s374, 1
      %p378 = scmp.eq.s32.totalorder %s27, 1
      %p379 = scmp.ne.s32.totalorder %s374, %s376
      %p380 = scmp.eq.s32.totalorder %s27, 0
      %p381 = por %p379, %p380
      %p382 = scmp.ne.s32.totalorder %s374, %s376
      %p383 = scmp.eq.s32.totalorder %s32, 1
      %p384 = por %p382, %p383
      %p385 = scmp.ne.s32.totalorder %s376, %s377
      %p386 = scmp.eq.s32.totalorder %s32, 0
      %p387 = por %p385, %p386
      %p388 = scmp.ne.s32.totalorder %s376, %s377
      %p389 = scmp.eq.s32.totalorder %s33, 1
      %p390 = por %p388, %p389
      %p392 = scmp.ne.s32.totalorder %s377, %s391
      %p393 = scmp.eq.s32.totalorder %s33, 0
      %p394 = por %p392, %p393
      %s396 = sadd.s32 %s395, 1
      %p399 = scmp.eq.s32.totalorder %s27, 1
      %p400 = scmp.ne.s32.totalorder %s395, %s397
      %p401 = scmp.eq.s32.totalorder %s27, 0
      %p402 = por %p400, %p401
      %p403 = scmp.ne.s32.totalorder %s395, %s397
      %p404 = scmp.eq.s32.totalorder %s32, 1
      %p405 = por %p403, %p404
      %p406 = scmp.ne.s32.totalorder %s397, %s398
      %p407 = scmp.eq.s32.totalorder %s32, 0
      %p408 = por %p406, %p407
      %p409 = scmp.ne.s32.totalorder %s397, %s398
      %p410 = scmp.eq.s32.totalorder %s33, 1
      %p411 = por %p409, %p410
      %p413 = scmp.ne.s32.totalorder %s398, %s412
      %p414 = scmp.eq.s32.totalorder %s33, 0
      %p415 = por %p413, %p414
      %s417 = sadd.s32 %s416, 1
      %p420 = scmp.eq.s32.totalorder %s27, 1
      %p421 = scmp.ne.s32.totalorder %s416, %s418
      %p422 = scmp.eq.s32.totalorder %s27, 0
      %p423 = por %p421, %p422
      %p424 = scmp.ne.s32.totalorder %s416, %s418
      %p425 = scmp.eq.s32.totalorder %s32, 1
      %p426 = por %p424, %p425
      %p427 = scmp.ne.s32.totalorder %s418, %s419
      %p428 = scmp.eq.s32.totalorder %s32, 0
      %p429 = por %p427, %p428
      %p430 = scmp.ne.s32.totalorder %s418, %s419
      %p431 = scmp.eq.s32.totalorder %s33, 1
      %p432 = por %p430, %p431
      %p434 = scmp.ne.s32.totalorder %s419, %s433
      %p435 = scmp.eq.s32.totalorder %s33, 0
      %p436 = por %p434, %p435
      %s437 = ssub.s32 %s34, %s46
      %s438 = ssub.s32 %s35, %s42
      %s439 = sor.u32 %s437, %s438
      %p440 = scmp.eq.s32.totalorder %s439, 0
      %s442 = sadd.s32 %s441, 1
      %s443 = scalar_select %p440, %s441, %s442
      %p446 = pneg %p440
      %p447 = scmp.eq.s32.totalorder %s27, 1
      %p448 = por %p446, %p447
      %p449 = scmp.ne.s32.totalorder %s441, %s444
      %p450 = scmp.eq.s32.totalorder %s27, 0
      %p451 = por %p449, %p450
      %p452 = scmp.ne.s32.totalorder %s441, %s444
      %p453 = scmp.eq.s32.totalorder %s32, 1
      %p454 = por %p452, %p453
      %p455 = scmp.ne.s32.totalorder %s444, %s445
      %p456 = scmp.eq.s32.totalorder %s32, 0
      %p457 = por %p455, %p456
      %p458 = scmp.ne.s32.totalorder %s444, %s445
      %p459 = scmp.eq.s32.totalorder %s33, 1
      %p460 = por %p458, %p459
      %p462 = scmp.ne.s32.totalorder %s445, %s461
      %p463 = scmp.eq.s32.totalorder %s33, 0
      %p464 = por %p462, %p463
      %p465 = scmp.le.s32.totalorder 1, %s27
      %p466 = scmp.lt.s32.totalorder %s27, 3
      %p467 = pnand %p465, %p466
      %p468 = pneg %p467
      // Predicated region
      $region9: #{tpu_custom_call.1} parent=5 // pred_check
        _
      $region10: #{tpu_custom_call.1} parent=5 // pred_check_branch
        %470 = sbr.rel (%p467) target = $region12
      $region11: #{tpu_custom_call.1} parent=5 // pred_region
        %s471 = ssub.s32 %s27, 1
        // Predicated region
        $region13: #{tpu_custom_call.1} parent=11 // pred_check
          %p472 = pneg %p114
        $region14: #{tpu_custom_call.1} parent=11 // pred_check_branch
          %474 = sbr.rel (%p472) target = $region16
        $region15: #{tpu_custom_call.1} parent=11 // pred_region
          _
        $region16: #{tpu_custom_call.1} parent=11 // pred_fallthru
          _
        // Predicated region
        $region17: #{tpu_custom_call.1} parent=11 // pred_check
          %p475 = pneg %p135
        $region18: #{tpu_custom_call.1} parent=11 // pred_check_branch
          %477 = sbr.rel (%p475) target = $region20
        $region19: #{tpu_custom_call.1} parent=11 // pred_region
          _
        $region20: #{tpu_custom_call.1} parent=11 // pred_fallthru
          _
        // Predicated region
        $region21: #{tpu_custom_call.1} parent=11 // pred_check
          %p478 = pneg %p156
        $region22: #{tpu_custom_call.1} parent=11 // pred_check_branch
          %480 = sbr.rel (%p478) target = $region24
        $region23: #{tpu_custom_call.1} parent=11 // pred_region
          _
        $region24: #{tpu_custom_call.1} parent=11 // pred_fallthru
          _
        // Predicated region
        $region25: #{tpu_custom_call.1} parent=11 // pred_check
          %p481 = pneg %p177
        $region26: #{tpu_custom_call.1} parent=11 // pred_check_branch
          %483 = sbr.rel (%p481) target = $region28
        $region27: #{tpu_custom_call.1} parent=11 // pred_region
          _
        $region28: #{tpu_custom_call.1} parent=11 // pred_fallthru
          _
        // Predicated region
        $region29: #{tpu_custom_call.1} parent=11 // pred_check
          %p484 = pneg %p198
        $region30: #{tpu_custom_call.1} parent=11 // pred_check_branch
          %486 = sbr.rel (%p484) target = $region32
        $region31: #{tpu_custom_call.1} parent=11 // pred_region
          _
        $region32: #{tpu_custom_call.1} parent=11 // pred_fallthru
          _
        // Predicated region
        $region33: #{tpu_custom_call.1} parent=11 // pred_check
          %p487 = pneg %p219
        $region34: #{tpu_custom_call.1} parent=11 // pred_check_branch
          %489 = sbr.rel (%p487) target = $region36
        $region35: #{tpu_custom_call.1} parent=11 // pred_region
          _
        $region36: #{tpu_custom_call.1} parent=11 // pred_fallthru
          _
        // Predicated region
        $region37: #{tpu_custom_call.1} parent=11 // pred_check
          %p490 = pneg %p240
        $region38: #{tpu_custom_call.1} parent=11 // pred_check_branch
          %492 = sbr.rel (%p490) target = $region40
        $region39: #{tpu_custom_call.1} parent=11 // pred_region
          _
        $region40: #{tpu_custom_call.1} parent=11 // pred_fallthru
          _
        // Predicated region
        $region41: #{tpu_custom_call.1} parent=11 // pred_check
          %p493 = pneg %p261
        $region42: #{tpu_custom_call.1} parent=11 // pred_check_branch
          %495 = sbr.rel (%p493) target = $region44
        $region43: #{tpu_custom_call.1} parent=11 // pred_region
          _
        $region44: #{tpu_custom_call.1} parent=11 // pred_fallthru
          _
        // Predicated region
        $region45: #{tpu_custom_call.1} parent=11 // pred_check
          %p496 = pneg %p282
        $region46: #{tpu_custom_call.1} parent=11 // pred_check_branch
          %498 = sbr.rel (%p496) target = $region48
        $region47: #{tpu_custom_call.1} parent=11 // pred_region
          _
        $region48: #{tpu_custom_call.1} parent=11 // pred_fallthru
          _
        // Predicated region
        $region49: #{tpu_custom_call.1} parent=11 // pred_check
          %p499 = pneg %p303
        $region50: #{tpu_custom_call.1} parent=11 // pred_check_branch
          %501 = sbr.rel (%p499) target = $region52
        $region51: #{tpu_custom_call.1} parent=11 // pred_region
          _
        $region52: #{tpu_custom_call.1} parent=11 // pred_fallthru
          _
        // Predicated region
        $region53: #{tpu_custom_call.1} parent=11 // pred_check
          %p502 = pneg %p324
        $region54: #{tpu_custom_call.1} parent=11 // pred_check_branch
          %504 = sbr.rel (%p502) target = $region56
        $region55: #{tpu_custom_call.1} parent=11 // pred_region
          _
        $region56: #{tpu_custom_call.1} parent=11 // pred_fallthru
          _
        // Predicated region
        $region57: #{tpu_custom_call.1} parent=11 // pred_check
          %p505 = pneg %p345
        $region58: #{tpu_custom_call.1} parent=11 // pred_check_branch
          %507 = sbr.rel (%p505) target = $region60
        $region59: #{tpu_custom_call.1} parent=11 // pred_region
          _
        $region60: #{tpu_custom_call.1} parent=11 // pred_fallthru
          _
        // Predicated region
        $region61: #{tpu_custom_call.1} parent=11 // pred_check
          %p508 = pneg %p366
        $region62: #{tpu_custom_call.1} parent=11 // pred_check_branch
          %510 = sbr.rel (%p508) target = $region64
        $region63: #{tpu_custom_call.1} parent=11 // pred_region
          _
        $region64: #{tpu_custom_call.1} parent=11 // pred_fallthru
          _
        // Predicated region
        $region65: #{tpu_custom_call.1} parent=11 // pred_check
          %p511 = pneg %p387
        $region66: #{tpu_custom_call.1} parent=11 // pred_check_branch
          %513 = sbr.rel (%p511) target = $region68
        $region67: #{tpu_custom_call.1} parent=11 // pred_region
          _
        $region68: #{tpu_custom_call.1} parent=11 // pred_fallthru
          _
        // Predicated region
        $region69: #{tpu_custom_call.1} parent=11 // pred_check
          %p514 = pneg %p408
        $region70: #{tpu_custom_call.1} parent=11 // pred_check_branch
          %516 = sbr.rel (%p514) target = $region72
        $region71: #{tpu_custom_call.1} parent=11 // pred_region
          _
        $region72: #{tpu_custom_call.1} parent=11 // pred_fallthru
          _
        // Predicated region
        $region73: #{tpu_custom_call.1} parent=11 // pred_check
          %p517 = pneg %p429
        $region74: #{tpu_custom_call.1} parent=11 // pred_check_branch
          %519 = sbr.rel (%p517) target = $region76
        $region75: #{tpu_custom_call.1} parent=11 // pred_region
          _
        $region76: #{tpu_custom_call.1} parent=11 // pred_fallthru
          _
      $region12: #{tpu_custom_call.1} parent=5 // pred_fallthru
        _
      %p520 = scmp.lt.s32.totalorder %s27, 2
      // Predicated region
      $region77: #{tpu_custom_call.1} parent=5 // pred_check
        %p521 = pneg %p520
      $region78: #{tpu_custom_call.1} parent=5 // pred_check_branch
        %523 = sbr.rel (%p521) target = $region80
      $region79: #{tpu_custom_call.1} parent=5 // pred_region
        // Predicated region
        $region81: #{tpu_custom_call.1} parent=79 // pred_check
          %p524 = pneg %p61
        $region82: #{tpu_custom_call.1} parent=79 // pred_check_branch
          %526 = sbr.rel (%p524) target = $region84
        $region83: #{tpu_custom_call.1} parent=79 // pred_region
          %p527 = scmp.lt.s32.totalorder %s34, 1
          %s528 = scalar_select %p527, %s34, 1
          %p529 = scmp.lt.s32.totalorder %s35, 0
          %s530 = scalar_select %p529, %s35, 0
          %s531 = sadd.s32 %s530, %s528
          %s532 = smul.addr %s531, 8
          %s533 = scalar_lea.vmem %s0, %s532
        $region84: #{tpu_custom_call.1} parent=79 // pred_fallthru
          _
        // Predicated region
        $region85: #{tpu_custom_call.1} parent=79 // pred_check
          %p534 = pneg %p87
        $region86: #{tpu_custom_call.1} parent=79 // pred_check_branch
          %536 = sbr.rel (%p534) target = $region88
        $region87: #{tpu_custom_call.1} parent=79 // pred_region
          %p537 = scmp.lt.s32.totalorder %s34, 1
          %s538 = scalar_select %p537, %s34, 1
          %s539 = smul.addr %s538, 8
          %s540 = scalar_lea.vmem %s1, %s539
        $region88: #{tpu_custom_call.1} parent=79 // pred_fallthru
          _
      $region80: #{tpu_custom_call.1} parent=5 // pred_fallthru
        _
      %p541 = scmp.le.s32.totalorder 1, %s27
      %p542 = scmp.lt.s32.totalorder %s27, 3
      %p543 = pnand %p541, %p542
      %p544 = pneg %p543
      // Predicated region
      $region89: #{tpu_custom_call.1} parent=5 // pred_check
        _
      $region90: #{tpu_custom_call.1} parent=5 // pred_check_branch
        %546 = sbr.rel (%p543) target = $region92
      $region91: #{tpu_custom_call.1} parent=5 // pred_region
        %s547 = ssub.s32 %s27, 1
        %p548 = scmp.lt.s32.totalorder %s36, 1
        %s549 = scalar_select %p548, %s36, 1
        %p550 = scmp.lt.s32.totalorder %s37, 0
        %s551 = scalar_select %p550, %s37, 0
        %s552 = sadd.s32 %s551, %s549
        %s553 = smul.addr %s552, 8
        %s554 = scalar_lea.vmem %s0, %s553
        %p555 = pneg %p67
        %p556 = pneg %p64
        %p557 = scmp.lt.s32.totalorder %s36, 1
        %s558 = scalar_select %p557, %s36, 1
        %s559 = smul.addr %s558, 8
        %s560 = scalar_lea.vmem %s1, %s559
        %p561 = pneg %p93
        %p562 = pneg %p90
        %p563 = pneg %p114
        %p564 = pneg %p111
        %p565 = pneg %p135
        %p566 = pneg %p132
        %p567 = pneg %p156
        %p568 = pneg %p153
        %p569 = pneg %p177
        %p570 = pneg %p174
        %p571 = pneg %p198
        %p572 = pneg %p195
        %p573 = pneg %p219
        %p574 = pneg %p216
        %p575 = pneg %p240
        %p576 = pneg %p237
        %p577 = pneg %p261
        %p578 = pneg %p258
        %p579 = pneg %p282
        %p580 = pneg %p279
        %p581 = pneg %p303
        %p582 = pneg %p300
        %p583 = pneg %p324
        %p584 = pneg %p321
        %p585 = pneg %p345
        %p586 = pneg %p342
        %p587 = pneg %p366
        %p588 = pneg %p363
        %p589 = pneg %p387
        %p590 = pneg %p384
        %p591 = pneg %p408
        %p592 = pneg %p405
        %p593 = pneg %p429
        %p594 = pneg %p426
        %p595 = pneg %p457
        %p596 = pneg %p454
        %s597 = sand.u32 %s444, 1
        %s598 = scalar_lea.sflag [#allocation3], %s597
        %s599 = sand.u32 %s444, 1
        %s600 = smul.addr %s599, 8
        %s601 = scalar_lea.vmem [#allocation2], %s600
        %p602 = scmp.lt.s32.totalorder %s36, 1
        %s603 = scalar_select %p602, %s36, 1
        %p604 = scmp.lt.s32.totalorder %s37, 0
        %s605 = scalar_select %p604, %s37, 0
        %s606 = sadd.s32 %s605, %s603
        %s607 = smul.addr %s606, 8
        %s608 = scalar_lea.vmem %s0, %s607
        %p609 = scmp.lt.s32.totalorder %s36, 1
        %s610 = scalar_select %p609, %s36, 1
        %s611 = smul.addr %s610, 8
        %s612 = scalar_lea.vmem %s1, %s611
        %v614 = vld [vmem:[%s608] sm:$0xff]
        %v615 = vpack.c.bf16 %v614, %v614
        %v616 = vld [vmem:[%s612] sm:$0xff]
        %v617 = vpack.c.bf16 %v616, %v616
        %v618 = vld [vmem:[%s2] sm:$0xf]
        %v619 = vld [vmem:[%s2 + $0x4] sm:$0xf]
        %v620 = vld [vmem:[%s2 + $0x8] sm:$0xf]
        %v621 = vld [vmem:[%s2 + $0xc] sm:$0xf]
        %v622 = vld [vmem:[%s5] sm:$0x1]
        %v624 = vperm.slane %v622, 0
        %v630 = vunpack.c.l.b16 %v618
        %v631 = vunpack.c.l.b16 %v619
        %v632 = vunpack.c.l.b16 %v620
        %v633 = vunpack.c.l.b16 %v621
        %v634 = vpack.c.b16 %v631, %v630
        %v635 = vpack.c.b16 %v633, %v632
        %vm638 = vcmask 261120
        %v640 = vsel %vm638, %v615, 0
        %642 = vmatpush.bf16.msra.mxu0 0
        %643 = vmatpush.bf16.msra.mxu0 0
        %644 = vmatpush.bf16.msra.mxu0 0
        %645 = vmatpush.bf16.msra.mxu0 0
        %646 = vmatpush.bf16.msra.mxu0 0
        %647 = vmatpush.bf16.msra.mxu0 0
        %648 = vmatpush.bf16.msra.mxu0 %v635
        %649 = vmatpush.bf16.msra.mxu0 %v634
        %650 = vmatmul.bf16.gmra.mxu0 %v640
        %v651 = vpop.f32.mrf.mxu0
        %v652 = vadd.f32 %v624, %v651
        %v653 = vpop.f32.mrf.mxu0
        %654 = vdwg.mxu0
        %v655 = vpack.c.bf16 %v652, %v652
        %v656 = vld [vmem:[%s3] sm:$0xf]
        %v657 = vld [vmem:[%s3 + $0x4] sm:$0xf]
        %v658 = vld [vmem:[%s3 + $0x8] sm:$0xf]
        %v659 = vld [vmem:[%s3 + $0xc] sm:$0xf]
        %v660 = vld [vmem:[%s6] sm:$0x1]
        %v662 = vperm.slane %v660, 0
        %v668 = vunpack.c.l.b16 %v656
        %v669 = vunpack.c.l.b16 %v657
        %v670 = vunpack.c.l.b16 %v658
        %v671 = vunpack.c.l.b16 %v659
        %v672 = vpack.c.b16 %v669, %v668
        %v673 = vpack.c.b16 %v671, %v670
        %v677 = vsel %vm638, %v617, 0
        %679 = vmatpush.bf16.msra.mxu0 0
        %680 = vmatpush.bf16.msra.mxu0 0
        %681 = vmatpush.bf16.msra.mxu0 0
        %682 = vmatpush.bf16.msra.mxu0 0
        %683 = vmatpush.bf16.msra.mxu0 0
        %684 = vmatpush.bf16.msra.mxu0 0
        %685 = vmatpush.bf16.msra.mxu0 %v673
        %686 = vmatpush.bf16.msra.mxu0 %v672
        %687 = vmatmul.bf16.gmra.mxu0 %v677
        %v688 = vpop.f32.mrf.mxu0
        %v689 = vadd.f32 %v662, %v688
        %v690 = vpop.f32.mrf.mxu0
        %691 = vdwg.mxu0
        %v692 = vpack.c.bf16 %v689, %v689
        %v693 = vld [vmem:[%s4] sm:$0xf]
        %v694 = vld [vmem:[%s4 + $0x4] sm:$0xf]
        %v695 = vld [vmem:[%s4 + $0x8] sm:$0xf]
        %v696 = vld [vmem:[%s4 + $0xc] sm:$0xf]
        %v697 = vld [vmem:[%s7] sm:$0x1]
        %v699 = vperm.slane %v697, 0
        %v705 = vunpack.c.l.b16 %v693
        %v706 = vunpack.c.l.b16 %v694
        %v707 = vunpack.c.l.b16 %v695
        %v708 = vunpack.c.l.b16 %v696
        %v709 = vpack.c.b16 %v706, %v705
        %v710 = vpack.c.b16 %v708, %v707
        %713 = vmatpush.bf16.msra.mxu0 0
        %714 = vmatpush.bf16.msra.mxu0 0
        %715 = vmatpush.bf16.msra.mxu0 0
        %716 = vmatpush.bf16.msra.mxu0 0
        %717 = vmatpush.bf16.msra.mxu0 0
        %718 = vmatpush.bf16.msra.mxu0 0
        %719 = vmatpush.bf16.msra.mxu0 %v710
        %720 = vmatpush.bf16.msra.mxu0 %v709
        %721 = vmatmul.bf16.gmra.mxu0 %v677
        %v722 = vpop.f32.mrf.mxu0
        %v723 = vadd.f32 %v699, %v722
        %v724 = vpop.f32.mrf.mxu0
        %725 = vdwg.mxu0
        %v726 = vpack.c.bf16 %v723, %v723
        %vm727 = vcmask 64512
        %v729 = vsel %vm727, %v655, 0
        %v732 = vsel %vm727, %v692, 0
        %734 = vmatpush.bf16.xpose.msra.mxu0 0
        %735 = vmatpush.bf16.xpose.msra.mxu0 0
        %736 = vmatpush.bf16.xpose.msra.mxu0 0
        %737 = vmatpush.bf16.xpose.msra.mxu0 0
        %738 = vmatpush.bf16.xpose.msra.mxu0 0
        %739 = vmatpush.bf16.xpose.msra.mxu0 0
        %740 = vmatpush.bf16.xpose.msra.mxu0 0
        %741 = vmatpush.bf16.xpose.msra.mxu0 %v732
        %742 = vmatmul.bf16.gmra.mxu0 %v729
        %v743 = vpop.f32.mrf.mxu0
        %v744 = vadd.f32 0.0, %v743
        %v745 = vpop.f32.mrf.mxu0
        %746 = vdwg.mxu0
        %v747 = vsel %vm727, %v744, -inf
        %748 = vmax.xlane.f32.xlu0 %v747
        %v749 = vpop.xlane.xlu0 %748
        %v750 = vsub.f32 -inf, %v749
        %v751 = vmul.f32 %v750, 1.442695
        %v752 = vpow.pop %v751
        %v753 = vsub.f32 %v744, %v749
        %v754 = vmul.f32 %v753, 1.442695
        %v755 = vpow.pop %v754
        %v756 = vmul.f32 %v752, 0.0
        %v757 = vsel %vm727, %v755, 0.0
        %758 = vadd.xlane.f32.xlu0 %v757
        %v759 = vpop.xlane.xlu0 %758
        %v760 = vadd.f32 %v756, %v759
        %v761 = vpack.c.bf16 %v755, %v755
        %v763 = vsel %vm727, %v761, 0
        %vm765 = vcmask 1043456
        %v767 = vsel %vm765, %v726, 0
        %769 = vmatpush.bf16.msra.mxu0 0
        %770 = vmatpush.bf16.msra.mxu0 0
        %771 = vmatpush.bf16.msra.mxu0 0
        %772 = vmatpush.bf16.msra.mxu0 0
        %773 = vmatpush.bf16.msra.mxu0 0
        %774 = vmatpush.bf16.msra.mxu0 0
        %775 = vmatpush.bf16.msra.mxu0 0
        %776 = vmatpush.bf16.msra.mxu0 %v767
        %777 = vmatmul.bf16.gmra.mxu0 %v763
        %v778 = vpop.f32.mrf.mxu0
        %v779 = vadd.f32 0.0, %v778
        %v780 = vpop.f32.mrf.mxu0
        %781 = vdwg.mxu0
        %v782 = vadd.f32 %v756, %v779
        %v783 = vrcp.pop %v760
        %v784 = vmul.f32 %v782, %v783
        %v785 = vpack.c.bf16 %v784, %v784
        %v786 = vld [vmem:[%s8] sm:$0xf]
        %s787 = scalar_lea.vmem %s2, 16
        %v788 = vld [vmem:[%s787] sm:$0xf]
        %v789 = vld [vmem:[%s787 + $0x4] sm:$0xf]
        %v790 = vld [vmem:[%s787 + $0x8] sm:$0xf]
        %v791 = vld [vmem:[%s787 + $0xc] sm:$0xf]
        %s792 = scalar_lea.vmem %s5, 1
        %v793 = vld [vmem:[%s792] sm:$0x1]
        %v795 = vperm.slane %v793, 0
        %v801 = vunpack.c.l.b16 %v788
        %v802 = vunpack.c.l.b16 %v789
        %v803 = vunpack.c.l.b16 %v790
        %v804 = vunpack.c.l.b16 %v791
        %v805 = vpack.c.b16 %v802, %v801
        %v806 = vpack.c.b16 %v804, %v803
        %809 = vmatpush.bf16.msra.mxu0 0
        %810 = vmatpush.bf16.msra.mxu0 0
        %811 = vmatpush.bf16.msra.mxu0 0
        %812 = vmatpush.bf16.msra.mxu0 0
        %813 = vmatpush.bf16.msra.mxu0 0
        %814 = vmatpush.bf16.msra.mxu0 0
        %815 = vmatpush.bf16.msra.mxu0 %v806
        %816 = vmatpush.bf16.msra.mxu0 %v805
        %817 = vmatmul.bf16.gmra.mxu0 %v640
        %v818 = vpop.f32.mrf.mxu0
        %v819 = vadd.f32 %v795, %v818
        %v820 = vpop.f32.mrf.mxu0
        %821 = vdwg.mxu0
        %v822 = vpack.c.bf16 %v819, %v819
        %s823 = scalar_lea.vmem %s3, 16
        %v824 = vld [vmem:[%s823] sm:$0xf]
        %v825 = vld [vmem:[%s823 + $0x4] sm:$0xf]
        %v826 = vld [vmem:[%s823 + $0x8] sm:$0xf]
        %v827 = vld [vmem:[%s823 + $0xc] sm:$0xf]
        %s828 = scalar_lea.vmem %s6, 1
        %v829 = vld [vmem:[%s828] sm:$0x1]
        %v831 = vperm.slane %v829, 0
        %v837 = vunpack.c.l.b16 %v824
        %v838 = vunpack.c.l.b16 %v825
        %v839 = vunpack.c.l.b16 %v826
        %v840 = vunpack.c.l.b16 %v827
        %v841 = vpack.c.b16 %v838, %v837
        %v842 = vpack.c.b16 %v840, %v839
        %845 = vmatpush.bf16.msra.mxu0 0
        %846 = vmatpush.bf16.msra.mxu0 0
        %847 = vmatpush.bf16.msra.mxu0 0
        %848 = vmatpush.bf16.msra.mxu0 0
        %849 = vmatpush.bf16.msra.mxu0 0
        %850 = vmatpush.bf16.msra.mxu0 0
        %851 = vmatpush.bf16.msra.mxu0 %v842
        %852 = vmatpush.bf16.msra.mxu0 %v841
        %853 = vmatmul.bf16.gmra.mxu0 %v677
        %v854 = vpop.f32.mrf.mxu0
        %v855 = vadd.f32 %v831, %v854
        %v856 = vpop.f32.mrf.mxu0
        %857 = vdwg.mxu0
        %v858 = vpack.c.bf16 %v855, %v855
        %s859 = scalar_lea.vmem %s4, 16
        %v860 = vld [vmem:[%s859] sm:$0xf]
        %v861 = vld [vmem:[%s859 + $0x4] sm:$0xf]
        %v862 = vld [vmem:[%s859 + $0x8] sm:$0xf]
        %v863 = vld [vmem:[%s859 + $0xc] sm:$0xf]
        %s864 = scalar_lea.vmem %s7, 1
        %v865 = vld [vmem:[%s864] sm:$0x1]
        %v867 = vperm.slane %v865, 0
        %v873 = vunpack.c.l.b16 %v860
        %v874 = vunpack.c.l.b16 %v861
        %v875 = vunpack.c.l.b16 %v862
        %v876 = vunpack.c.l.b16 %v863
        %v877 = vpack.c.b16 %v874, %v873
        %v878 = vpack.c.b16 %v876, %v875
        %881 = vmatpush.bf16.msra.mxu0 0
        %882 = vmatpush.bf16.msra.mxu0 0
        %883 = vmatpush.bf16.msra.mxu0 0
        %884 = vmatpush.bf16.msra.mxu0 0
        %885 = vmatpush.bf16.msra.mxu0 0
        %886 = vmatpush.bf16.msra.mxu0 0
        %887 = vmatpush.bf16.msra.mxu0 %v878
        %888 = vmatpush.bf16.msra.mxu0 %v877
        %889 = vmatmul.bf16.gmra.mxu0 %v677
        %v890 = vpop.f32.mrf.mxu0
        %v891 = vadd.f32 %v867, %v890
        %v892 = vpop.f32.mrf.mxu0
        %893 = vdwg.mxu0
        %v894 = vpack.c.bf16 %v891, %v891
        %v896 = vsel %vm727, %v822, 0
        %v899 = vsel %vm727, %v858, 0
        %901 = vmatpush.bf16.xpose.msra.mxu0 0
        %902 = vmatpush.bf16.xpose.msra.mxu0 0
        %903 = vmatpush.bf16.xpose.msra.mxu0 0
        %904 = vmatpush.bf16.xpose.msra.mxu0 0
        %905 = vmatpush.bf16.xpose.msra.mxu0 0
        %906 = vmatpush.bf16.xpose.msra.mxu0 0
        %907 = vmatpush.bf16.xpose.msra.mxu0 0
        %908 = vmatpush.bf16.xpose.msra.mxu0 %v899
        %909 = vmatmul.bf16.gmra.mxu0 %v896
        %v910 = vpop.f32.mrf.mxu0
        %v911 = vadd.f32 0.0, %v910
        %v912 = vpop.f32.mrf.mxu0
        %913 = vdwg.mxu0
        %v914 = vsel %vm727, %v911, -inf
        %915 = vmax.xlane.f32.xlu0 %v914
        %v916 = vpop.xlane.xlu0 %915
        %v917 = vsub.f32 -inf, %v916
        %v918 = vmul.f32 %v917, 1.442695
        %v919 = vpow.pop %v918
        %v920 = vsub.f32 %v911, %v916
        %v921 = vmul.f32 %v920, 1.442695
        %v922 = vpow.pop %v921
        %v923 = vmul.f32 %v919, 0.0
        %v924 = vsel %vm727, %v922, 0.0
        %925 = vadd.xlane.f32.xlu0 %v924
        %v926 = vpop.xlane.xlu0 %925
        %v927 = vadd.f32 %v923, %v926
        %v928 = vpack.c.bf16 %v922, %v922
        %v930 = vsel %vm727, %v928, 0
        %v933 = vsel %vm765, %v894, 0
        %935 = vmatpush.bf16.msra.mxu0 0
        %936 = vmatpush.bf16.msra.mxu0 0
        %937 = vmatpush.bf16.msra.mxu0 0
        %938 = vmatpush.bf16.msra.mxu0 0
        %939 = vmatpush.bf16.msra.mxu0 0
        %940 = vmatpush.bf16.msra.mxu0 0
        %941 = vmatpush.bf16.msra.mxu0 0
        %942 = vmatpush.bf16.msra.mxu0 %v933
        %943 = vmatmul.bf16.gmra.mxu0 %v930
        %v944 = vpop.f32.mrf.mxu0
        %v945 = vadd.f32 0.0, %v944
        %v946 = vpop.f32.mrf.mxu0
        %947 = vdwg.mxu0
        %v948 = vadd.f32 %v923, %v945
        %v949 = vrcp.pop %v927
        %v950 = vmul.f32 %v948, %v949
        %v951 = vpack.c.bf16 %v950, %v950
        %s952 = scalar_lea.vmem %s8, 4
        %v953 = vld [vmem:[%s952] sm:$0xf]
        %v955 = vsel %vm727, %v951, 0
        %v958 = vsel %vm765, %v953, 0
        %960 = vmatpush.bf16.msra.mxu0 0
        %961 = vmatpush.bf16.msra.mxu0 0
        %962 = vmatpush.bf16.msra.mxu0 0
        %963 = vmatpush.bf16.msra.mxu0 0
        %964 = vmatpush.bf16.msra.mxu0 0
        %965 = vmatpush.bf16.msra.mxu0 0
        %966 = vmatpush.bf16.msra.mxu0 0
        %967 = vmatpush.bf16.msra.mxu0 %v958
        %968 = vmatmul.bf16.gmra.mxu0 %v955
        %v969 = vpop.f32.mrf.mxu0
        %v970 = vadd.f32 0.0, %v969
        %v971 = vpop.f32.mrf.mxu0
        %972 = vdwg.mxu0
        %v974 = vsel %vm727, %v785, 0
        %v977 = vsel %vm765, %v786, 0
        %979 = vmatpush.bf16.msra.mxu0 0
        %980 = vmatpush.bf16.msra.mxu0 0
        %981 = vmatpush.bf16.msra.mxu0 0
        %982 = vmatpush.bf16.msra.mxu0 0
        %983 = vmatpush.bf16.msra.mxu0 0
        %984 = vmatpush.bf16.msra.mxu0 0
        %985 = vmatpush.bf16.msra.mxu0 0
        %986 = vmatpush.bf16.msra.mxu0 %v977
        %987 = vmatmul.bf16.gmra.mxu0 %v974
        %v988 = vpop.f32.mrf.mxu0
        %v989 = vadd.f32 %v970, %v988
        %v990 = vpop.f32.mrf.mxu0
        %991 = vdwg.mxu0
        %s992 = scalar_lea.vmem %s2, 32
        %v993 = vld [vmem:[%s992] sm:$0xf]
        %v994 = vld [vmem:[%s992 + $0x4] sm:$0xf]
        %v995 = vld [vmem:[%s992 + $0x8] sm:$0xf]
        %v996 = vld [vmem:[%s992 + $0xc] sm:$0xf]
        %s997 = scalar_lea.vmem %s5, 2
        %v998 = vld [vmem:[%s997] sm:$0x1]
        %v1000 = vperm.slane %v998, 0
        %v1006 = vunpack.c.l.b16 %v993
        %v1007 = vunpack.c.l.b16 %v994
        %v1008 = vunpack.c.l.b16 %v995
        %v1009 = vunpack.c.l.b16 %v996
        %v1010 = vpack.c.b16 %v1007, %v1006
        %v1011 = vpack.c.b16 %v1009, %v1008
        %1014 = vmatpush.bf16.msra.mxu0 0
        %1015 = vmatpush.bf16.msra.mxu0 0
        %1016 = vmatpush.bf16.msra.mxu0 0
        %1017 = vmatpush.bf16.msra.mxu0 0
        %1018 = vmatpush.bf16.msra.mxu0 0
        %1019 = vmatpush.bf16.msra.mxu0 0
        %1020 = vmatpush.bf16.msra.mxu0 %v1011
        %1021 = vmatpush.bf16.msra.mxu0 %v1010
        %1022 = vmatmul.bf16.gmra.mxu0 %v640
        %v1023 = vpop.f32.mrf.mxu0
        %v1024 = vadd.f32 %v1000, %v1023
        %v1025 = vpop.f32.mrf.mxu0
        %1026 = vdwg.mxu0
        %v1027 = vpack.c.bf16 %v1024, %v1024
        %s1028 = scalar_lea.vmem %s3, 32
        %v1029 = vld [vmem:[%s1028] sm:$0xf]
        %v1030 = vld [vmem:[%s1028 + $0x4] sm:$0xf]
        %v1031 = vld [vmem:[%s1028 + $0x8] sm:$0xf]
        %v1032 = vld [vmem:[%s1028 + $0xc] sm:$0xf]
        %s1033 = scalar_lea.vmem %s6, 2
        %v1034 = vld [vmem:[%s1033] sm:$0x1]
        %v1036 = vperm.slane %v1034, 0
        %v1042 = vunpack.c.l.b16 %v1029
        %v1043 = vunpack.c.l.b16 %v1030
        %v1044 = vunpack.c.l.b16 %v1031
        %v1045 = vunpack.c.l.b16 %v1032
        %v1046 = vpack.c.b16 %v1043, %v1042
        %v1047 = vpack.c.b16 %v1045, %v1044
        %1050 = vmatpush.bf16.msra.mxu0 0
        %1051 = vmatpush.bf16.msra.mxu0 0
        %1052 = vmatpush.bf16.msra.mxu0 0
        %1053 = vmatpush.bf16.msra.mxu0 0
        %1054 = vmatpush.bf16.msra.mxu0 0
        %1055 = vmatpush.bf16.msra.mxu0 0
        %1056 = vmatpush.bf16.msra.mxu0 %v1047
        %1057 = vmatpush.bf16.msra.mxu0 %v1046
        %1058 = vmatmul.bf16.gmra.mxu0 %v677
        %v1059 = vpop.f32.mrf.mxu0
        %v1060 = vadd.f32 %v1036, %v1059
        %v1061 = vpop.f32.mrf.mxu0
        %1062 = vdwg.mxu0
        %v1063 = vpack.c.bf16 %v1060, %v1060
        %s1064 = scalar_lea.vmem %s4, 32
        %v1065 = vld [vmem:[%s1064] sm:$0xf]
        %v1066 = vld [vmem:[%s1064 + $0x4] sm:$0xf]
        %v1067 = vld [vmem:[%s1064 + $0x8] sm:$0xf]
        %v1068 = vld [vmem:[%s1064 + $0xc] sm:$0xf]
        %s1069 = scalar_lea.vmem %s7, 2
        %v1070 = vld [vmem:[%s1069] sm:$0x1]
        %v1072 = vperm.slane %v1070, 0
        %v1078 = vunpack.c.l.b16 %v1065
        %v1079 = vunpack.c.l.b16 %v1066
        %v1080 = vunpack.c.l.b16 %v1067
        %v1081 = vunpack.c.l.b16 %v1068
        %v1082 = vpack.c.b16 %v1079, %v1078
        %v1083 = vpack.c.b16 %v1081, %v1080
        %1086 = vmatpush.bf16.msra.mxu0 0
        %1087 = vmatpush.bf16.msra.mxu0 0
        %1088 = vmatpush.bf16.msra.mxu0 0
        %1089 = vmatpush.bf16.msra.mxu0 0
        %1090 = vmatpush.bf16.msra.mxu0 0
        %1091 = vmatpush.bf16.msra.mxu0 0
        %1092 = vmatpush.bf16.msra.mxu0 %v1083
        %1093 = vmatpush.bf16.msra.mxu0 %v1082
        %1094 = vmatmul.bf16.gmra.mxu0 %v677
        %v1095 = vpop.f32.mrf.mxu0
        %v1096 = vadd.f32 %v1072, %v1095
        %v1097 = vpop.f32.mrf.mxu0
        %1098 = vdwg.mxu0
        %v1099 = vpack.c.bf16 %v1096, %v1096
        %v1101 = vsel %vm727, %v1027, 0
        %v1104 = vsel %vm727, %v1063, 0
        %1106 = vmatpush.bf16.xpose.msra.mxu0 0
        %1107 = vmatpush.bf16.xpose.msra.mxu0 0
        %1108 = vmatpush.bf16.xpose.msra.mxu0 0
        %1109 = vmatpush.bf16.xpose.msra.mxu0 0
        %1110 = vmatpush.bf16.xpose.msra.mxu0 0
        %1111 = vmatpush.bf16.xpose.msra.mxu0 0
        %1112 = vmatpush.bf16.xpose.msra.mxu0 0
        %1113 = vmatpush.bf16.xpose.msra.mxu0 %v1104
        %1114 = vmatmul.bf16.gmra.mxu0 %v1101
        %v1115 = vpop.f32.mrf.mxu0
        %v1116 = vadd.f32 0.0, %v1115
        %v1117 = vpop.f32.mrf.mxu0
        %1118 = vdwg.mxu0
        %v1119 = vsel %vm727, %v1116, -inf
        %1120 = vmax.xlane.f32.xlu0 %v1119
        %v1121 = vpop.xlane.xlu0 %1120
        %v1122 = vsub.f32 -inf, %v1121
        %v1123 = vmul.f32 %v1122, 1.442695
        %v1124 = vpow.pop %v1123
        %v1125 = vsub.f32 %v1116, %v1121
        %v1126 = vmul.f32 %v1125, 1.442695
        %v1127 = vpow.pop %v1126
        %v1128 = vmul.f32 %v1124, 0.0
        %v1129 = vsel %vm727, %v1127, 0.0
        %1130 = vadd.xlane.f32.xlu0 %v1129
        %v1131 = vpop.xlane.xlu0 %1130
        %v1132 = vadd.f32 %v1128, %v1131
        %v1133 = vpack.c.bf16 %v1127, %v1127
        %v1135 = vsel %vm727, %v1133, 0
        %v1138 = vsel %vm765, %v1099, 0
        %1140 = vmatpush.bf16.msra.mxu0 0
        %1141 = vmatpush.bf16.msra.mxu0 0
        %1142 = vmatpush.bf16.msra.mxu0 0
        %1143 = vmatpush.bf16.msra.mxu0 0
        %1144 = vmatpush.bf16.msra.mxu0 0
        %1145 = vmatpush.bf16.msra.mxu0 0
        %1146 = vmatpush.bf16.msra.mxu0 0
        %1147 = vmatpush.bf16.msra.mxu0 %v1138
        %1148 = vmatmul.bf16.gmra.mxu0 %v1135
        %v1149 = vpop.f32.mrf.mxu0
        %v1150 = vadd.f32 0.0, %v1149
        %v1151 = vpop.f32.mrf.mxu0
        %1152 = vdwg.mxu0
        %v1153 = vadd.f32 %v1128, %v1150
        %v1154 = vrcp.pop %v1132
        %v1155 = vmul.f32 %v1153, %v1154
        %v1156 = vpack.c.bf16 %v1155, %v1155
        %s1157 = scalar_lea.vmem %s8, 8
        %v1158 = vld [vmem:[%s1157] sm:$0xf]
        %v1160 = vsel %vm727, %v1156, 0
        %v1163 = vsel %vm765, %v1158, 0
        %1165 = vmatpush.bf16.msra.mxu0 0
        %1166 = vmatpush.bf16.msra.mxu0 0
        %1167 = vmatpush.bf16.msra.mxu0 0
        %1168 = vmatpush.bf16.msra.mxu0 0
        %1169 = vmatpush.bf16.msra.mxu0 0
        %1170 = vmatpush.bf16.msra.mxu0 0
        %1171 = vmatpush.bf16.msra.mxu0 0
        %1172 = vmatpush.bf16.msra.mxu0 %v1163
        %1173 = vmatmul.bf16.gmra.mxu0 %v1160
        %v1174 = vpop.f32.mrf.mxu0
        %v1175 = vadd.f32 0.0, %v1174
        %v1176 = vpop.f32.mrf.mxu0
        %1177 = vdwg.mxu0
        %v1178 = vadd.f32 %v989, %v1175
        %s1179 = scalar_lea.vmem %s2, 48
        %v1180 = vld [vmem:[%s1179] sm:$0xf]
        %v1181 = vld [vmem:[%s1179 + $0x4] sm:$0xf]
        %v1182 = vld [vmem:[%s1179 + $0x8] sm:$0xf]
        %v1183 = vld [vmem:[%s1179 + $0xc] sm:$0xf]
        %s1184 = scalar_lea.vmem %s5, 3
        %v1185 = vld [vmem:[%s1184] sm:$0x1]
        %v1187 = vperm.slane %v1185, 0
        %v1193 = vunpack.c.l.b16 %v1180
        %v1194 = vunpack.c.l.b16 %v1181
        %v1195 = vunpack.c.l.b16 %v1182
        %v1196 = vunpack.c.l.b16 %v1183
        %v1197 = vpack.c.b16 %v1194, %v1193
        %v1198 = vpack.c.b16 %v1196, %v1195
        %1201 = vmatpush.bf16.msra.mxu0 0
        %1202 = vmatpush.bf16.msra.mxu0 0
        %1203 = vmatpush.bf16.msra.mxu0 0
        %1204 = vmatpush.bf16.msra.mxu0 0
        %1205 = vmatpush.bf16.msra.mxu0 0
        %1206 = vmatpush.bf16.msra.mxu0 0
        %1207 = vmatpush.bf16.msra.mxu0 %v1198
        %1208 = vmatpush.bf16.msra.mxu0 %v1197
        %1209 = vmatmul.bf16.gmra.mxu0 %v640
        %v1210 = vpop.f32.mrf.mxu0
        %v1211 = vadd.f32 %v1187, %v1210
        %v1212 = vpop.f32.mrf.mxu0
        %1213 = vdwg.mxu0
        %v1214 = vpack.c.bf16 %v1211, %v1211
        %s1215 = scalar_lea.vmem %s3, 48
        %v1216 = vld [vmem:[%s1215] sm:$0xf]
        %v1217 = vld [vmem:[%s1215 + $0x4] sm:$0xf]
        %v1218 = vld [vmem:[%s1215 + $0x8] sm:$0xf]
        %v1219 = vld [vmem:[%s1215 + $0xc] sm:$0xf]
        %s1220 = scalar_lea.vmem %s6, 3
        %v1221 = vld [vmem:[%s1220] sm:$0x1]
        %v1223 = vperm.slane %v1221, 0
        %v1229 = vunpack.c.l.b16 %v1216
        %v1230 = vunpack.c.l.b16 %v1217
        %v1231 = vunpack.c.l.b16 %v1218
        %v1232 = vunpack.c.l.b16 %v1219
        %v1233 = vpack.c.b16 %v1230, %v1229
        %v1234 = vpack.c.b16 %v1232, %v1231
        %1237 = vmatpush.bf16.msra.mxu0 0
        %1238 = vmatpush.bf16.msra.mxu0 0
        %1239 = vmatpush.bf16.msra.mxu0 0
        %1240 = vmatpush.bf16.msra.mxu0 0
        %1241 = vmatpush.bf16.msra.mxu0 0
        %1242 = vmatpush.bf16.msra.mxu0 0
        %1243 = vmatpush.bf16.msra.mxu0 %v1234
        %1244 = vmatpush.bf16.msra.mxu0 %v1233
        %1245 = vmatmul.bf16.gmra.mxu0 %v677
        %v1246 = vpop.f32.mrf.mxu0
        %v1247 = vadd.f32 %v1223, %v1246
        %v1248 = vpop.f32.mrf.mxu0
        %1249 = vdwg.mxu0
        %v1250 = vpack.c.bf16 %v1247, %v1247
        %s1251 = scalar_lea.vmem %s4, 48
        %v1252 = vld [vmem:[%s1251] sm:$0xf]
        %v1253 = vld [vmem:[%s1251 + $0x4] sm:$0xf]
        %v1254 = vld [vmem:[%s1251 + $0x8] sm:$0xf]
        %v1255 = vld [vmem:[%s1251 + $0xc] sm:$0xf]
        %s1256 = scalar_lea.vmem %s7, 3
        %v1257 = vld [vmem:[%s1256] sm:$0x1]
        %v1259 = vperm.slane %v1257, 0
        %v1265 = vunpack.c.l.b16 %v1252
        %v1266 = vunpack.c.l.b16 %v1253
        %v1267 = vunpack.c.l.b16 %v1254
        %v1268 = vunpack.c.l.b16 %v1255
        %v1269 = vpack.c.b16 %v1266, %v1265
        %v1270 = vpack.c.b16 %v1268, %v1267
        %1273 = vmatpush.bf16.msra.mxu0 0
        %1274 = vmatpush.bf16.msra.mxu0 0
        %1275 = vmatpush.bf16.msra.mxu0 0
        %1276 = vmatpush.bf16.msra.mxu0 0
        %1277 = vmatpush.bf16.msra.mxu0 0
        %1278 = vmatpush.bf16.msra.mxu0 0
        %1279 = vmatpush.bf16.msra.mxu0 %v1270
        %1280 = vmatpush.bf16.msra.mxu0 %v1269
        %1281 = vmatmul.bf16.gmra.mxu0 %v677
        %v1282 = vpop.f32.mrf.mxu0
        %v1283 = vadd.f32 %v1259, %v1282
        %v1284 = vpop.f32.mrf.mxu0
        %1285 = vdwg.mxu0
        %v1286 = vpack.c.bf16 %v1283, %v1283
        %v1288 = vsel %vm727, %v1214, 0
        %v1291 = vsel %vm727, %v1250, 0
        %1293 = vmatpush.bf16.xpose.msra.mxu0 0
        %1294 = vmatpush.bf16.xpose.msra.mxu0 0
        %1295 = vmatpush.bf16.xpose.msra.mxu0 0
        %1296 = vmatpush.bf16.xpose.msra.mxu0 0
        %1297 = vmatpush.bf16.xpose.msra.mxu0 0
        %1298 = vmatpush.bf16.xpose.msra.mxu0 0
        %1299 = vmatpush.bf16.xpose.msra.mxu0 0
        %1300 = vmatpush.bf16.xpose.msra.mxu0 %v1291
        %1301 = vmatmul.bf16.gmra.mxu0 %v1288
        %v1302 = vpop.f32.mrf.mxu0
        %v1303 = vadd.f32 0.0, %v1302
        %v1304 = vpop.f32.mrf.mxu0
        %1305 = vdwg.mxu0
        %v1306 = vsel %vm727, %v1303, -inf
        %1307 = vmax.xlane.f32.xlu0 %v1306
        %v1308 = vpop.xlane.xlu0 %1307
        %v1309 = vsub.f32 -inf, %v1308
        %v1310 = vmul.f32 %v1309, 1.442695
        %v1311 = vpow.pop %v1310
        %v1312 = vsub.f32 %v1303, %v1308
        %v1313 = vmul.f32 %v1312, 1.442695
        %v1314 = vpow.pop %v1313
        %v1315 = vmul.f32 %v1311, 0.0
        %v1316 = vsel %vm727, %v1314, 0.0
        %1317 = vadd.xlane.f32.xlu0 %v1316
        %v1318 = vpop.xlane.xlu0 %1317
        %v1319 = vadd.f32 %v1315, %v1318
        %v1320 = vpack.c.bf16 %v1314, %v1314
        %v1322 = vsel %vm727, %v1320, 0
        %v1325 = vsel %vm765, %v1286, 0
        %1327 = vmatpush.bf16.msra.mxu0 0
        %1328 = vmatpush.bf16.msra.mxu0 0
        %1329 = vmatpush.bf16.msra.mxu0 0
        %1330 = vmatpush.bf16.msra.mxu0 0
        %1331 = vmatpush.bf16.msra.mxu0 0
        %1332 = vmatpush.bf16.msra.mxu0 0
        %1333 = vmatpush.bf16.msra.mxu0 0
        %1334 = vmatpush.bf16.msra.mxu0 %v1325
        %1335 = vmatmul.bf16.gmra.mxu0 %v1322
        %v1336 = vpop.f32.mrf.mxu0
        %v1337 = vadd.f32 0.0, %v1336
        %v1338 = vpop.f32.mrf.mxu0
        %1339 = vdwg.mxu0
        %v1340 = vadd.f32 %v1315, %v1337
        %v1341 = vrcp.pop %v1319
        %v1342 = vmul.f32 %v1340, %v1341
        %v1343 = vpack.c.bf16 %v1342, %v1342
        %s1344 = scalar_lea.vmem %s8, 12
        %v1345 = vld [vmem:[%s1344] sm:$0xf]
        %v1347 = vsel %vm727, %v1343, 0
        %v1350 = vsel %vm765, %v1345, 0
        %1352 = vmatpush.bf16.msra.mxu0 0
        %1353 = vmatpush.bf16.msra.mxu0 0
        %1354 = vmatpush.bf16.msra.mxu0 0
        %1355 = vmatpush.bf16.msra.mxu0 0
        %1356 = vmatpush.bf16.msra.mxu0 0
        %1357 = vmatpush.bf16.msra.mxu0 0
        %1358 = vmatpush.bf16.msra.mxu0 0
        %1359 = vmatpush.bf16.msra.mxu0 %v1350
        %1360 = vmatmul.bf16.gmra.mxu0 %v1347
        %v1361 = vpop.f32.mrf.mxu0
        %v1362 = vadd.f32 0.0, %v1361
        %v1363 = vpop.f32.mrf.mxu0
        %1364 = vdwg.mxu0
        %v1365 = vadd.f32 %v1178, %v1362
        %v1366 = vld [vmem:[%s9] sm:$0x1]
        %v1368 = vperm.slane %v1366, 0
        %v1370 = vadd.f32 %v1365, %v1368
        %v1371 = vadd.f32 %v614, %v1370
        %v1372 = vld [vmem:[%s14] sm:$0x1]
        %v1373 = vld [vmem:[%s15] sm:$0x1]
        %v1374 = vsel %vm638, %v1371, 0.0
        %1375 = vadd.xlane.f32.xlu0 %v1374
        %v1376 = vpop.xlane.xlu0 %1375
        %v1377 = vrcp.pop 32.0
        %v1378 = vmul.f32 32.0, %v1377
        %v1379 = vsub.f32 1.0, %v1378
        %v1380 = vmul.f32 %v1377, %v1379
        %v1381 = vadd.f32 %v1377, %v1380
        %vm1382 = vweird.f32 %v1377
        %v1383 = vsel %vm1382, %v1377, %v1381
        %v1384 = vmul.f32 %v1376, %v1383
        %v1385 = vmul.f32 %v1371, %v1371
        %v1386 = vsel %vm638, %v1385, 0.0
        %1387 = vadd.xlane.f32.xlu0 %v1386
        %v1388 = vpop.xlane.xlu0 %1387
        %v1389 = vmul.f32 %v1388, %v1383
        %v1390 = vmul.f32 %v1384, %v1384
        %v1391 = vsub.f32 %v1389, %v1390
        %v1392 = vmax.f32 %v1391, 0.0
        %v1393 = vsub.f32 %v1371, %v1384
        %v1394 = vadd.f32 %v1392, 1e-05
        %v1395 = vrsqrt.pop %v1394
        %v1396 = vmul.f32 %v1395, %v1394
        %v1397 = vmul.f32 %v1396, %v1395
        %v1398 = vmul.f32 0.5, %v1397
        %v1399 = vsub.f32 1.5, %v1398
        %v1400 = vmul.f32 %v1395, %v1399
        %vm1401 = vweird.f32 %v1394
        %vm1402 = vweird.f32 %v1395
        %vm1403 = vmor %vm1401, %vm1402
        %v1404 = vsel %vm1403, %v1395, %v1400
        %v1405 = vmul.f32 %v1393, %v1404
        %v1407 = vperm.slane %v1372, 0
        %v1409 = vmul.f32 %v1405, %v1407
        %v1411 = vperm.slane %v1373, 0
        %v1413 = vadd.f32 %v1409, %v1411
        %v1414 = vpack.c.bf16 %v1413, %v1413
        %v1415 = vld [vmem:[%s10] sm:$0xf]
        %v1416 = vld [vmem:[%s10 + $0x4] sm:$0xf]
        %v1417 = vld [vmem:[%s10 + $0x8] sm:$0xf]
        %v1418 = vld [vmem:[%s10 + $0xc] sm:$0xf]
        %v1419 = vld [vmem:[%s11] sm:$0x1]
        %v1421 = vperm.slane %v1419, 0
        %v1427 = vunpack.c.l.b16 %v1415
        %v1428 = vunpack.c.l.b16 %v1416
        %v1429 = vunpack.c.l.b16 %v1417
        %v1430 = vunpack.c.l.b16 %v1418
        %v1431 = vpack.c.b16 %v1428, %v1427
        %v1432 = vpack.c.b16 %v1430, %v1429
        %v1436 = vsel %vm638, %v1414, 0
        %1438 = vmatpush.bf16.msra.mxu0 0
        %1439 = vmatpush.bf16.msra.mxu0 0
        %1440 = vmatpush.bf16.msra.mxu0 0
        %1441 = vmatpush.bf16.msra.mxu0 0
        %1442 = vmatpush.bf16.msra.mxu0 0
        %1443 = vmatpush.bf16.msra.mxu0 0
        %1444 = vmatpush.bf16.msra.mxu0 %v1432
        %1445 = vmatpush.bf16.msra.mxu0 %v1431
        %1446 = vmatmul.bf16.gmra.mxu0 %v1436
        %v1447 = vpop.f32.mrf.mxu0
        %v1448 = vadd.f32 %v1421, %v1447
        %v1449 = vpop.f32.mrf.mxu0
        %1450 = vdwg.mxu0
        %v1451 = vmax.f32 %v1448, 0.0
        %v1452 = vpack.c.bf16 %v1451, %v1451
        %v1453 = vld [vmem:[%s12] sm:$0xf]
        %v1454 = vld [vmem:[%s12 + $0x4] sm:$0xf]
        %v1455 = vld [vmem:[%s12 + $0x8] sm:$0xf]
        %v1456 = vld [vmem:[%s12 + $0xc] sm:$0xf]
        %v1457 = vld [vmem:[%s12 + $0x10] sm:$0xf]
        %v1458 = vld [vmem:[%s12 + $0x14] sm:$0xf]
        %v1459 = vld [vmem:[%s12 + $0x18] sm:$0xf]
        %v1460 = vld [vmem:[%s12 + $0x1c] sm:$0xf]
        %v1461 = vld [vmem:[%s13] sm:$0x1]
        %v1463 = vperm.slane %v1461, 0
        %v1473 = vunpack.c.l.b16 %v1453
        %v1474 = vunpack.c.l.b16 %v1454
        %v1475 = vunpack.c.l.b16 %v1455
        %v1476 = vunpack.c.l.b16 %v1456
        %v1477 = vunpack.c.l.b16 %v1457
        %v1478 = vunpack.c.l.b16 %v1458
        %v1479 = vunpack.c.l.b16 %v1459
        %v1480 = vunpack.c.l.b16 %v1460
        %v1481 = vpack.c.b16 %v1474, %v1473
        %v1482 = vpack.c.b16 %v1476, %v1475
        %v1483 = vpack.c.b16 %v1478, %v1477
        %v1484 = vpack.c.b16 %v1480, %v1479
        %vm1489 = vcmask 523264
        %v1491 = vsel %vm1489, %v1452, 0
        %1493 = vmatpush.bf16.msra.mxu0 0
        %1494 = vmatpush.bf16.msra.mxu0 0
        %1495 = vmatpush.bf16.msra.mxu0 0
        %1496 = vmatpush.bf16.msra.mxu0 0
        %1497 = vmatpush.bf16.msra.mxu0 %v1484
        %1498 = vmatpush.bf16.msra.mxu0 %v1483
        %1499 = vmatpush.bf16.msra.mxu0 %v1482
        %1500 = vmatpush.bf16.msra.mxu0 %v1481
        %1501 = vmatmul.bf16.gmra.mxu0 %v1491
        %v1502 = vpop.f32.mrf.mxu0
        %v1503 = vadd.f32 %v1463, %v1502
        %v1504 = vpop.f32.mrf.mxu0
        %1505 = vdwg.mxu0
        %v1506 = vadd.f32 %v1413, %v1503
        %v1507 = vld [vmem:[%s16] sm:$0x1]
        %v1508 = vld [vmem:[%s17] sm:$0x1]
        %v1509 = vsel %vm638, %v1506, 0.0
        %1510 = vadd.xlane.f32.xlu0 %v1509
        %v1511 = vpop.xlane.xlu0 %1510
        %v1512 = vmul.f32 %v1511, %v1383
        %v1513 = vmul.f32 %v1506, %v1506
        %v1514 = vsel %vm638, %v1513, 0.0
        %1515 = vadd.xlane.f32.xlu0 %v1514
        %v1516 = vpop.xlane.xlu0 %1515
        %v1517 = vmul.f32 %v1516, %v1383
        %v1518 = vmul.f32 %v1512, %v1512
        %v1519 = vsub.f32 %v1517, %v1518
        %v1520 = vmax.f32 %v1519, 0.0
        %v1521 = vsub.f32 %v1506, %v1512
        %v1522 = vadd.f32 %v1520, 1e-05
        %v1523 = vrsqrt.pop %v1522
        %v1524 = vmul.f32 %v1523, %v1522
        %v1525 = vmul.f32 %v1524, %v1523
        %v1526 = vmul.f32 0.5, %v1525
        %v1527 = vsub.f32 1.5, %v1526
        %v1528 = vmul.f32 %v1523, %v1527
        %vm1529 = vweird.f32 %v1522
        %vm1530 = vweird.f32 %v1523
        %vm1531 = vmor %vm1529, %vm1530
        %v1532 = vsel %vm1531, %v1523, %v1528
        %v1533 = vmul.f32 %v1521, %v1532
        %v1535 = vperm.slane %v1507, 0
        %v1537 = vmul.f32 %v1533, %v1535
        %v1539 = vperm.slane %v1508, 0
        %v1541 = vadd.f32 %v1537, %v1539
        %1542 = vst.msk [vmem:[%s601] sm:$0xff] %vm638, %v1541
        %s1543 = sand.u32 %s444, 1
        %s1544 = scalar_lea.sflag [#allocation3], %s1543
        %s1545 = sand.u32 %s444, 1
        %s1546 = smul.addr %s1545, 8
        %s1547 = scalar_lea.vmem [#allocation2], %s1546
        // Predicated region
        $region93: #{tpu_custom_call.1} parent=91 // pred_check
          %p1548 = pneg %p454
        $region94: #{tpu_custom_call.1} parent=91 // pred_check_branch
          %1550 = sbr.rel (%p1548) target = $region96
        $region95: #{tpu_custom_call.1} parent=91 // pred_region
          %1552 = vsyncadd %s1544, 0
          %s1553 = sadd.s32 %s37, %s36
          %s1554 = smul.addr %s1553, 8
          %s1555 = scalar_lea.hbm %s18, %s1554
          %s1557 = sshll.u32 %s1547, 4
          %s1558 = int_to_ptr.vmem [resolvable:$true] %s1557
          %s1559 = sshll.u32 %s1555, 4
          %s1560 = int_to_ptr.hbm [resolvable:$true] %s1559
          %1562 = dma.vmem_to_hbm [thread:$0]  %s1558, 128, %s1560, %s1544
        $region96: #{tpu_custom_call.1} parent=91 // pred_fallthru
          _
      $region92: #{tpu_custom_call.1} parent=5 // pred_fallthru
        _
      %p1563 = scmp.le.s32.totalorder 2, %s27
      // Predicated region
      $region97: #{tpu_custom_call.1} parent=5 // pred_check
        %p1564 = pneg %p1563
      $region98: #{tpu_custom_call.1} parent=5 // pred_check_branch
        %1566 = sbr.rel (%p1564) target = $region100
      $region99: #{tpu_custom_call.1} parent=5 // pred_region
        %s1567 = ssub.s32 %s27, 2
        // Predicated region
        $region101: #{tpu_custom_call.1} parent=99 // pred_check
          %p1568 = pneg %p460
        $region102: #{tpu_custom_call.1} parent=99 // pred_check_branch
          %1570 = sbr.rel (%p1568) target = $region104
        $region103: #{tpu_custom_call.1} parent=99 // pred_region
          %s1571 = sand.u32 %s445, 1
          %s1572 = scalar_lea.sflag [#allocation3], %s1571
          %s1573 = sand.u32 %s445, 1
          %s1574 = smul.addr %s1573, 8
          %s1575 = scalar_lea.vmem [#allocation2], %s1574
          %1577 = dma.done %s1572, 128
        $region104: #{tpu_custom_call.1} parent=99 // pred_fallthru
          _
      $region100: #{tpu_custom_call.1} parent=5 // pred_fallthru
        _
    $region6: #{tpu_custom_call.1} parent=1 // loop_footer
      %s31 = sadd.s32 1, %s27
    $region7: #{tpu_custom_call.1} parent=1 // loop_footer_branch
      %26 = sbr.rel target = $region3
    $region8: #{tpu_custom_call.1} parent=1 // loop_exit
      _
    %1578 = vsyncpa [#allocation3], 1
    %s1579 = scalar_lea.sflag [#allocation3], 1
    %1580 = vsyncpa %s1579, 1

</llo_original>
